<compile_context>
chip_gen: v5e
topology: v5e:2x2
jax: 0.10.0
libtpu: 0.0.40
codegen_flags: <defaults>
</compile_context>

<pallas_src>
import functools
import math

import jax
import jax.numpy as jnp
from jax.experimental import pallas as pl
from jax.experimental.pallas import tpu as pltpu


# -----------------------------------------------------------------------------
# Weight-slab packing (2 constant DMAs instead of ~18)
# -----------------------------------------------------------------------------
class _SlabPacker:
    """Packs 2-D weights into one (rows, 128) slab; rows padded to multiples of 8
    so every in-kernel static slice is sublane-aligned."""

    def __init__(self, dtype, width=128):
        self.dtype, self.width = dtype, width
        self.chunks, self.index, self.off = [], {}, 0

    def add(self, name, arr):
        arr = jnp.asarray(arr, jnp.float32).astype(self.dtype)
        r, c = arr.shape
        assert c <= self.width, (name, arr.shape)
        rp = -(-r // 8) * 8
        padded = jnp.zeros((rp, self.width), self.dtype).at[:r, :c].set(arr)
        self.index[name] = (self.off, (r, c))
        self.chunks.append(padded)
        self.off += rp

    def finish(self):
        return jnp.concatenate(self.chunks, axis=0), dict(self.index)


def _num_tensorcores():
    # v7x has 2 TensorCores per chip; v5e/v6e have 1.  Best-effort detection so
    # the batch can split across both cores on v7x; falls back to 1 (serial grid).
    try:
        kind = jax.devices()[0].device_kind.lower()
    except Exception:
        return 1
    return 2 if "v7" in kind else 1


# -----------------------------------------------------------------------------
# Fused kernel: GRU -> residual net -> out_proj1 (Bb batch rows per grid step)
# -----------------------------------------------------------------------------
def _fused_kernel(feat_ref, h0_ref, emb_ref, w_ref, b_ref, o_ref, rc_ref, *,
                  batch_block, seq_len, embed_size, channels, n_layers,
                  out_size, windex, bindex):
    Bb, S, E, C, L, O = batch_block, seq_len, embed_size, channels, n_layers, out_size
    N = Bb * S
    f32, bf16 = jnp.float32, jnp.bfloat16

    def getw(name):                       # static slice of the bf16 weight slab
        off, (r, c) = windex[name]
        return w_ref[off:off + r, :c]

    def getb(name):                       # static slice of the f32 bias slab
        off, (r, c) = bindex[name]
        return b_ref[off:off + r, :c]

    I = feat_ref.shape[-1]
    feat = feat_ref[...].reshape(N, I)                         # (N, I) bf16, batch-major

    # --- one fused (N,I)x(I,3E+C) matmul: [GRU input proj | residual in-proj] --
    gi_all = (jnp.dot(feat, getw("wfused"), preferred_element_type=f32)
              + getb("bfused"))                                # (N, 3E+C) f32
    gi3 = gi_all[:, :3 * E].reshape(Bb, S, 3 * E)              # per-step GRU slices
    h2 = jax.nn.relu(gi_all[:, 3 * E:])                        # (N, C)

    # ------------------- GRU (batch_first, PyTorch gate order r, z, n) --------
    whh = getw("whh")                                          # (E, 3E) bf16
    bhh = getb("bhh")                                          # (1, 3E) f32
    h = h0_ref[...][:, 0, :]                                   # (Bb, E) f32
    for s in range(S):                # S small & static: fully unrolled chain
        gh = jnp.dot(h.astype(bf16), whh, preferred_element_type=f32) + bhh
        gi_s = gi3[:, s, :]                                    # (Bb, 3E)
        rz = jax.nn.sigmoid(gi_s[:, :2 * E] + gh[:, :2 * E])   # one EUP issue (r|z)
        r, z = rz[:, :E], rz[:, E:]
        n = jnp.tanh(gi_s[:, 2 * E:] + r * gh[:, 2 * E:])
        h = (1.0 - z) * n + z * h
        rc_ref[:, s:s + 1, :] = h[:, None, :]                  # bounded live range
    res_cond = rc_ref[...].reshape(N, E)                       # (N, E) f32, batch-major

    # ------------------- Residual net (gated dilated conv blocks) -------------
    emb_b = emb_ref[...][:, 0, :].astype(bf16)                 # (Bb, E)
    rc_bf = res_cond.astype(bf16)

    # Hoisted out of the layer loop: all step biases and the whole conditioner.
    sb_all = (jnp.dot(emb_b, getw("stpw"), preferred_element_type=f32)
              + getb("stpb"))                                  # (Bb, L*C)
    sb_full = jnp.broadcast_to(sb_all[:, None, :], (Bb, S, L * C)).reshape(N, L * C)
    cond_all = (jnp.dot(rc_bf, getw("cndw"), preferred_element_type=f32)
                + getb("cndb"))                                # (N, L*2C)

    skip = jnp.zeros((N, C), f32)
    srow = jax.lax.broadcasted_iota(jnp.int32, (N, C), 0) % S  # time index per row
    inv_sqrt2 = 1.0 / math.sqrt(2.0)
    for l in range(L):
        d = 2 ** l                                             # dilation, d < S
        hsl = h2 + sb_full[:, l * C:(l + 1) * C]               # (N, C)
        # kernel-3 "same" dilated conv taps via XLU rolls + masks; masks use the
        # within-sequence index so rolls never leak across batch-row boundaries.
        t0 = jnp.where(srow >= d, pltpu.roll(hsl, shift=d, axis=0), 0.0)
        t2 = jnp.where(srow < S - d, pltpu.roll(hsl, shift=N - d, axis=0), 0.0)
        stacked = jnp.concatenate([t0, hsl, t2], axis=-1).astype(bf16)   # (N, 3C)
        y = (jnp.dot(stacked, getw(f"convw{l}"), preferred_element_type=f32)
             + getb(f"convb{l}") + cond_all[:, l * 2 * C:(l + 1) * 2 * C])  # (N, 2C)
        gate = (jnp.tanh(y[:, :C]) * jax.nn.sigmoid(y[:, C:])).astype(bf16)
        zz = (jnp.dot(gate, getw(f"outw{l}"), preferred_element_type=f32)
              + getb(f"outb{l}"))                              # (N, 2C)
        h2 = (h2 + zz[:, :C]) * inv_sqrt2
        skip = skip + zz[:, C:]
    skip_act = jax.nn.relu(skip * (1.0 / math.sqrt(L))).astype(bf16)
    res_out = (jnp.dot(skip_act, getw("skpw"), preferred_element_type=f32)
               + getb("skpb"))                                 # (N, E)

    # ------------------- out_proj1 (fused epilogue) ----------------------------
    xin = (res_out + res_cond).astype(bf16)                    # (N, E)
    hmid = jnp.dot(xin, getw("p1w"), preferred_element_type=f32) + getb("p1b")
    # TODO(synk): PyTorch nn.GELU() default is the exact erf formulation; the
    # tanh approximation is used here for robust Mosaic lowering.
    hmid = jax.nn.gelu(hmid, approximate=True)
    if O == 1:
        # N=1 projection as VPU multiply + lane reduction (avoids 1/256 MXU fill).
        y_out = (jnp.sum(hmid * getw("p2w").astype(f32), axis=-1, keepdims=True)
                 + getb("p2b"))                                # (N, 1)
    else:
        y_out = (jnp.dot(hmid.astype(bf16), getw("p2w"),
                         preferred_element_type=f32) + getb("p2b"))
    o_ref[...] = y_out.reshape(Bb, S, O).astype(o_ref.dtype)


def fused_residual_denoise(feat, h0, step_emb, kp, *, num_blocks=None):
    B, S, I = feat.shape
    E, C, L, O = kp["embed_size"], kp["channels"], kp["n_layers"], kp["out_size"]
    assert 2 ** (L - 1) < S, "dilation must be smaller than sequence length"

    if num_blocks is None:
        # 2 parallel grid blocks iff the chip has 2 TensorCores (v7x); otherwise
        # fold the whole batch into a single block (grid is a serial loop on 1 TC).
        num_blocks = 2 if (_num_tensorcores() >= 2 and B >= 2 and B % 2 == 0) else 1
    assert B % num_blocks == 0
    Bb = B // num_blocks

    feat_bf = feat.astype(jnp.bfloat16)            # halve activation DMA bytes
    h0_3 = h0.reshape(B, 1, E).astype(jnp.float32)
    emb_3 = step_emb.reshape(B, 1, E).astype(jnp.float32)

    kernel = functools.partial(
        _fused_kernel, batch_block=Bb, seq_len=S, embed_size=E, channels=C,
        n_layers=L, out_size=O, windex=kp["windex"], bindex=kp["bindex"])

    def const_spec(arr):                           # constant slab: one full block
        return pl.BlockSpec(arr.shape, lambda b: (0, 0))

    # Total resident footprint (slabs + per-block activations + double buffers)
    # is well under 1 MiB -> no vmem_limit_bytes / tiling work needed, even on
    # v7x's 64 MiB VMEM.
    return pl.pallas_call(
        kernel,
        out_shape=jax.ShapeDtypeStruct((B, S, O), jnp.float32),
        grid=(num_blocks,),
        in_specs=[pl.BlockSpec((Bb, S, I), lambda b: (b, 0, 0)),
                  pl.BlockSpec((Bb, 1, E), lambda b: (b, 0, 0)),
                  pl.BlockSpec((Bb, 1, E), lambda b: (b, 0, 0)),
                  const_spec(kp["wslab"]), const_spec(kp["bslab"])],
        out_specs=pl.BlockSpec((Bb, S, O), lambda b: (b, 0, 0)),
        scratch_shapes=[pltpu.VMEM((Bb, S, E), jnp.float32)],
        compiler_params=pltpu.CompilerParams(
            dimension_semantics=("parallel",)),
    )(feat_bf, h0_3, emb_3, kp["wslab"], kp["bslab"])


# -----------------------------------------------------------------------------
# Glue: embeddings + parameter construction / packing + full forward
# -----------------------------------------------------------------------------
def trigono_time_embedding(v, embed_size):
    # v: (B, S) positive values (== exp(x[..., 0])) -> (B, S, 2 * embed_size)
    k = jnp.arange(embed_size, dtype=jnp.float32)
    freqs = jnp.exp(-math.log(10000.0) * k / max(embed_size - 1, 1))
    ang = v[..., None] * freqs
    return jnp.concatenate([jnp.sin(ang), jnp.cos(ang)], axis=-1)


def build_step_table(max_steps, embed_size):
    steps = jnp.arange(max_steps, dtype=jnp.float32)[:, None]
    half = embed_size // 2
    k = jnp.arange(half, dtype=jnp.float32)
    freqs = jnp.exp(-math.log(10000.0) * k / max(half - 1, 1))
    ang = steps * freqs
    return jnp.concatenate([jnp.sin(ang), jnp.cos(ang)], axis=-1)  # (max_steps, E)


def init_params(key, embed_size, output_size, residual_channels,
                max_steps=1000, residual_layers=2):
    E, C, L = embed_size, residual_channels, residual_layers
    I = 1 + 2 * E

    def uni(k, shape, fan_in):
        bound = 1.0 / math.sqrt(fan_in)
        return jax.random.uniform(k, shape, jnp.float32, -bound, bound)

    ks = iter(jax.random.split(key, 40))
    params = dict(
        embed_size=E, n_layers=L,
        # GRU (weights pre-transposed to (in, 3E); gate order r,z,n)
        gru_w_ih=uni(next(ks), (I, 3 * E), I),
        gru_w_hh=uni(next(ks), (E, 3 * E), E),
        gru_b_ih=uni(next(ks), (1, 3 * E), E),
        gru_b_hh=uni(next(ks), (1, 3 * E), E),
        # TimeStepEmbedding: sinusoidal table + 2-layer SiLU MLP
        step_table=build_step_table(max_steps, E),
        se_w1=uni(next(ks), (E, E), E), se_b1=uni(next(ks), (E,), E),
        se_w2=uni(next(ks), (E, E), E), se_b2=uni(next(ks), (E,), E),
        # out_proj1
        p1_w=uni(next(ks), (E, 2 * E), E), p1_b=uni(next(ks), (1, 2 * E), E),
        p2_w=uni(next(ks), (2 * E, output_size), 2 * E),
        p2_b=uni(next(ks), (1, output_size), 2 * E),
        # ResidualNet
        res=dict(
            in_w=uni(next(ks), (I, C), I), in_b=uni(next(ks), (1, C), I),
            dil_w=uni(next(ks), (L, 3, C, 2 * C), 3 * C),
            dil_b=uni(next(ks), (L, 1, 2 * C), 3 * C),
            stp_w=uni(next(ks), (L, E, C), E), stp_b=uni(next(ks), (L, 1, C), E),
            cnd_w=uni(next(ks), (L, E, 2 * C), E), cnd_b=uni(next(ks), (L, 1, 2 * C), E),
            out_w=uni(next(ks), (L, C, 2 * C), C), out_b=uni(next(ks), (L, 1, 2 * C), C),
            skp_w=uni(next(ks), (C, E), C), skp_b=uni(next(ks), (1, E), C),
        ),
    )
    return params


def pack_for_kernel(params):
    """One-time packing into two flat constant slabs (bf16 weights, f32 biases)
    plus the static row-offset index used by the kernel for zero-cost slices."""
    res = params["res"]
    E = params["embed_size"]
    L = params["n_layers"]
    C = res["in_w"].shape[1]
    O = params["p2_w"].shape[1]

    wp = _SlabPacker(jnp.bfloat16)
    bp = _SlabPacker(jnp.float32)

    # Fused feat projection: [GRU input proj | residual-net input proj]
    wp.add("wfused", jnp.concatenate([params["gru_w_ih"], res["in_w"]], axis=1))
    bp.add("bfused", jnp.concatenate([params["gru_b_ih"], res["in_b"]], axis=1))
    wp.add("whh", params["gru_w_hh"])
    bp.add("bhh", params["gru_b_hh"])
    # Hoisted, lane-stacked-over-L step / conditioner projections.
    wp.add("stpw", jnp.concatenate([res["stp_w"][l] for l in range(L)], axis=1))
    bp.add("stpb", jnp.concatenate([res["stp_b"][l] for l in range(L)], axis=1))
    wp.add("cndw", jnp.concatenate([res["cnd_w"][l] for l in range(L)], axis=1))
    bp.add("cndb", jnp.concatenate([res["cnd_b"][l] for l in range(L)], axis=1))
    for l in range(L):
        # Per-layer kernel-3 dilated conv weight as one (3C, 2C) matrix
        # (tap order: x[t-d], x[t], x[t+d]).
        wp.add(f"convw{l}",
               jnp.concatenate([res["dil_w"][l, k] for k in range(3)], axis=0))
        bp.add(f"convb{l}", res["dil_b"][l])
        wp.add(f"outw{l}", res["out_w"][l])
        bp.add(f"outb{l}", res["out_b"][l])
    wp.add("skpw", res["skp_w"])
    bp.add("skpb", res["skp_b"])
    wp.add("p1w", params["p1_w"])
    bp.add("p1b", params["p1_b"])
    p2w = params["p2_w"].T if O == 1 else params["p2_w"]   # (1, 2E) row for O==1
    wp.add("p2w", p2w)
    bp.add("p2b", params["p2_b"])

    wslab, windex = wp.finish()
    bslab, bindex = bp.finish()
    return dict(wslab=wslab, bslab=bslab, windex=windex, bindex=bindex,
                channels=C, n_layers=L, out_size=O, embed_size=E)


def residual_denoise_forward(params, kparams, x, t, cond):
    # x: (B, S, 1), t: (B,) int32 diffusion step, cond: (1, B, E) GRU h0
    E = params["embed_size"]

    # TrigonoTimeEmbedding on exp(x[..., 0])  (tiny elementwise XLA glue)
    trig = trigono_time_embedding(jnp.exp(x[..., 0]), E)           # (B, S, 2E)
    feat = jnp.concatenate([x, trig], axis=-1)                     # (B, S, 1+2E)

    # step_embed: table lookup + tiny SiLU MLP (XLA glue)
    emb = params["step_table"][t]                                  # (B, E)
    emb = jax.nn.silu(emb @ params["se_w1"] + params["se_b1"])
    emb = jax.nn.silu(emb @ params["se_w2"] + params["se_b2"])

    h0 = cond[0]                                                   # (B, E)

    # Fused GRU + residual_net + out_proj1 Pallas kernel
    return fused_residual_denoise(feat, h0, emb, kparams)


if __name__ == "__main__":
    key = jax.random.PRNGKey(0)
    kparam, kx, kc, kt = jax.random.split(key, 4)

    B, S = 2, 8
    embed_size, output_size, residual_channels = 32, 1, 16
    max_steps = 1000

    params = init_params(kparam, embed_size, output_size, residual_channels,
                         max_steps=max_steps, residual_layers=2)
    kparams = pack_for_kernel(params)

    x = 0.1 * jax.random.normal(kx, (B, S, 1), jnp.float32)
    t = jax.random.randint(kt, (B,), 0, max_steps)
    cond = jax.random.normal(kc, (1, B, embed_size), jnp.float32)

    out = residual_denoise_forward(params, kparams, x, t, cond)
    out = jax.block_until_ready(out)
    assert out.shape == (B, S, output_size), out.shape
    assert bool(jnp.all(jnp.isfinite(out)))
    print("KERNEL_OK")
</pallas_src>

<mosaic_0001>
module attributes {stable_mosaic.version = 11 : i64} {
  func.func @_fused_kernel(%arg0: i32, %arg1: memref<2x8x65xbf16, #tpu.memory_space<vmem>>, %arg2: memref<2x1x32xf32, #tpu.memory_space<vmem>>, %arg3: memref<2x1x32xf32, #tpu.memory_space<vmem>>, %arg4: memref<352x128xbf16, #tpu.memory_space<vmem>>, %arg5: memref<88x128xf32, #tpu.memory_space<vmem>>, %arg6: memref<2x8x1xf32, #tpu.memory_space<vmem>>, %arg7: memref<2x8x32xf32, #tpu.memory_space<vmem>>) attributes {dimension_semantics = [#tpu.dimension_semantics<parallel>], iteration_bounds = array<i64: 1>, scalar_prefetch = 0 : i64, scratch_operands = 1 : i64, tpu.core_type = #tpu.core_type<tc>, window_params = [{transform_indices = @transform_0, window_bounds = array<i64: 2, 8, 65>}, {transform_indices = @transform_1, window_bounds = array<i64: 2, 1, 32>}, {transform_indices = @transform_2, window_bounds = array<i64: 2, 1, 32>}, {pipeline_mode = #tpu.pipeline_mode<synchronous>, transform_indices = @transform_3, window_bounds = array<i64: 352, 128>}, {pipeline_mode = #tpu.pipeline_mode<synchronous>, transform_indices = @transform_4, window_bounds = array<i64: 88, 128>}, {transform_indices = @transform_5, window_bounds = array<i64: 2, 8, 1>}]} {
    %c0 = arith.constant 0 : index
    %c0_0 = arith.constant 0 : index
    %c0_1 = arith.constant 0 : index
    %0 = vector.load %arg1[%c0, %c0_0, %c0_1] : memref<2x8x65xbf16, #tpu.memory_space<vmem>>, vector<2x8x65xbf16>
    %1 = vector.shape_cast %0 : vector<2x8x65xbf16> to vector<16x65xbf16>
    %c0_2 = arith.constant 0 : index
    %c0_3 = arith.constant 0 : index
    %2 = vector.load %arg4[%c0_2, %c0_3] : memref<352x128xbf16, #tpu.memory_space<vmem>>, vector<65x112xbf16>
    %cst = arith.constant dense<0.000000e+00> : vector<16x112xf32>
    %3 = tpu.matmul %1, %2, %cst {dimension_numbers = #tpu.dot_dimension_numbers<[1], [0], [0], [1], [0, 0, 1, 1], [], []>} : vector<16x65xbf16>, vector<65x112xbf16>, vector<16x112xf32> -> vector<16x112xf32>
    %c0_4 = arith.constant 0 : index
    %c0_5 = arith.constant 0 : index
    %4 = vector.load %arg5[%c0_4, %c0_5] : memref<88x128xf32, #tpu.memory_space<vmem>>, vector<1x112xf32>
    %5 = vector.broadcast %4 : vector<1x112xf32> to vector<16x112xf32>
    %6 = arith.addf %3, %5 : vector<16x112xf32>
    %7 = vector.extract_strided_slice %6 {offsets = [0, 0], sizes = [16, 96], strides = [1, 1]} : vector<16x112xf32> to vector<16x96xf32>
    %8 = vector.shape_cast %7 : vector<16x96xf32> to vector<2x8x96xf32>
    %9 = vector.extract_strided_slice %6 {offsets = [0, 96], sizes = [16, 16], strides = [1, 1]} : vector<16x112xf32> to vector<16x16xf32>
    %cst_6 = arith.constant 0.000000e+00 : f32
    %10 = vector.broadcast %cst_6 : f32 to vector<16x16xf32>
    %11 = arith.maximumf %9, %10 : vector<16x16xf32>
    %c72 = arith.constant 72 : index
    %c0_7 = arith.constant 0 : index
    %12 = vector.load %arg4[%c72, %c0_7] : memref<352x128xbf16, #tpu.memory_space<vmem>>, vector<32x96xbf16>
    %c8 = arith.constant 8 : index
    %c0_8 = arith.constant 0 : index
    %13 = vector.load %arg5[%c8, %c0_8] : memref<88x128xf32, #tpu.memory_space<vmem>>, vector<1x96xf32>
    %c0_9 = arith.constant 0 : index
    %c0_10 = arith.constant 0 : index
    %c0_11 = arith.constant 0 : index
    %14 = vector.load %arg2[%c0_9, %c0_10, %c0_11] : memref<2x1x32xf32, #tpu.memory_space<vmem>>, vector<2x1x32xf32>
    %15 = vector.shape_cast %14 : vector<2x1x32xf32> to vector<2x32xf32>
    %16 = arith.truncf %15 : vector<2x32xf32> to vector<2x32xbf16>
    %cst_12 = arith.constant dense<0.000000e+00> : vector<2x96xf32>
    %17 = tpu.matmul %16, %12, %cst_12 {dimension_numbers = #tpu.dot_dimension_numbers<[1], [0], [0], [1], [0, 0, 1, 1], [], []>} : vector<2x32xbf16>, vector<32x96xbf16>, vector<2x96xf32> -> vector<2x96xf32>
    %18 = vector.broadcast %13 : vector<1x96xf32> to vector<2x96xf32>
    %19 = arith.addf %17, %18 : vector<2x96xf32>
    %20 = vector.extract_strided_slice %8 {offsets = [0, 0, 0], sizes = [2, 1, 96], strides = [1, 1, 1]} : vector<2x8x96xf32> to vector<2x1x96xf32>
    %21 = vector.shape_cast %20 : vector<2x1x96xf32> to vector<2x96xf32>
    %22 = vector.extract_strided_slice %21 {offsets = [0, 0], sizes = [2, 64], strides = [1, 1]} : vector<2x96xf32> to vector<2x64xf32>
    %23 = vector.extract_strided_slice %19 {offsets = [0, 0], sizes = [2, 64], strides = [1, 1]} : vector<2x96xf32> to vector<2x64xf32>
    %24 = arith.addf %22, %23 : vector<2x64xf32>
    %25 = arith.negf %24 : vector<2x64xf32>
    %26 = math.exp %25 : vector<2x64xf32>
    %cst_13 = arith.constant 1.000000e+00 : f32
    %27 = vector.broadcast %cst_13 : f32 to vector<2x64xf32>
    %28 = arith.addf %27, %26 : vector<2x64xf32>
    %29 = arith.divf %27, %28 : vector<2x64xf32>
    %30 = vector.extract_strided_slice %29 {offsets = [0, 0], sizes = [2, 32], strides = [1, 1]} : vector<2x64xf32> to vector<2x32xf32>
    %31 = vector.extract_strided_slice %29 {offsets = [0, 32], sizes = [2, 32], strides = [1, 1]} : vector<2x64xf32> to vector<2x32xf32>
    %32 = vector.extract_strided_slice %21 {offsets = [0, 64], sizes = [2, 32], strides = [1, 1]} : vector<2x96xf32> to vector<2x32xf32>
    %33 = vector.extract_strided_slice %19 {offsets = [0, 64], sizes = [2, 32], strides = [1, 1]} : vector<2x96xf32> to vector<2x32xf32>
    %34 = arith.mulf %30, %33 : vector<2x32xf32>
    %35 = arith.addf %32, %34 : vector<2x32xf32>
    %36 = math.tanh %35 : vector<2x32xf32>
    %cst_14 = arith.constant 1.000000e+00 : f32
    %37 = vector.broadcast %cst_14 : f32 to vector<2x32xf32>
    %38 = arith.subf %37, %31 : vector<2x32xf32>
    %39 = arith.mulf %38, %36 : vector<2x32xf32>
    %40 = arith.mulf %31, %15 : vector<2x32xf32>
    %41 = arith.addf %39, %40 : vector<2x32xf32>
    %42 = vector.shape_cast %41 : vector<2x32xf32> to vector<2x1x32xf32>
    %c0_15 = arith.constant 0 : index
    %c0_16 = arith.constant 0 : index
    %c0_17 = arith.constant 0 : index
    %43 = vector.load %arg7[%c0_15, %c0_16, %c0_17] : memref<2x8x32xf32, #tpu.memory_space<vmem>>, vector<2x1x32xf32>
    tpu.vector_store %arg7[%c0_15, %c0_16, %c0_17], %42 {strides = array<i32>} : memref<2x8x32xf32, #tpu.memory_space<vmem>>, vector<2x1x32xf32>,
    %44 = arith.truncf %41 : vector<2x32xf32> to vector<2x32xbf16>
    %cst_18 = arith.constant dense<0.000000e+00> : vector<2x96xf32>
    %45 = tpu.matmul %44, %12, %cst_18 {dimension_numbers = #tpu.dot_dimension_numbers<[1], [0], [0], [1], [0, 0, 1, 1], [], []>} : vector<2x32xbf16>, vector<32x96xbf16>, vector<2x96xf32> -> vector<2x96xf32>
    %46 = vector.broadcast %13 : vector<1x96xf32> to vector<2x96xf32>
    %47 = arith.addf %45, %46 : vector<2x96xf32>
    %48 = vector.extract_strided_slice %8 {offsets = [0, 1, 0], sizes = [2, 1, 96], strides = [1, 1, 1]} : vector<2x8x96xf32> to vector<2x1x96xf32>
    %49 = vector.shape_cast %48 : vector<2x1x96xf32> to vector<2x96xf32>
    %50 = vector.extract_strided_slice %49 {offsets = [0, 0], sizes = [2, 64], strides = [1, 1]} : vector<2x96xf32> to vector<2x64xf32>
    %51 = vector.extract_strided_slice %47 {offsets = [0, 0], sizes = [2, 64], strides = [1, 1]} : vector<2x96xf32> to vector<2x64xf32>
    %52 = arith.addf %50, %51 : vector<2x64xf32>
    %53 = arith.negf %52 : vector<2x64xf32>
    %54 = math.exp %53 : vector<2x64xf32>
    %cst_19 = arith.constant 1.000000e+00 : f32
    %55 = vector.broadcast %cst_19 : f32 to vector<2x64xf32>
    %56 = arith.addf %55, %54 : vector<2x64xf32>
    %57 = arith.divf %55, %56 : vector<2x64xf32>
    %58 = vector.extract_strided_slice %57 {offsets = [0, 0], sizes = [2, 32], strides = [1, 1]} : vector<2x64xf32> to vector<2x32xf32>
    %59 = vector.extract_strided_slice %57 {offsets = [0, 32], sizes = [2, 32], strides = [1, 1]} : vector<2x64xf32> to vector<2x32xf32>
    %60 = vector.extract_strided_slice %49 {offsets = [0, 64], sizes = [2, 32], strides = [1, 1]} : vector<2x96xf32> to vector<2x32xf32>
    %61 = vector.extract_strided_slice %47 {offsets = [0, 64], sizes = [2, 32], strides = [1, 1]} : vector<2x96xf32> to vector<2x32xf32>
    %62 = arith.mulf %58, %61 : vector<2x32xf32>
    %63 = arith.addf %60, %62 : vector<2x32xf32>
    %64 = math.tanh %63 : vector<2x32xf32>
    %cst_20 = arith.constant 1.000000e+00 : f32
    %65 = vector.broadcast %cst_20 : f32 to vector<2x32xf32>
    %66 = arith.subf %65, %59 : vector<2x32xf32>
    %67 = arith.mulf %66, %64 : vector<2x32xf32>
    %68 = arith.mulf %59, %41 : vector<2x32xf32>
    %69 = arith.addf %67, %68 : vector<2x32xf32>
    %70 = vector.shape_cast %69 : vector<2x32xf32> to vector<2x1x32xf32>
    %c0_21 = arith.constant 0 : index
    %c1 = arith.constant 1 : index
    %c0_22 = arith.constant 0 : index
    %71 = vector.load %arg7[%c0_21, %c1, %c0_22] : memref<2x8x32xf32, #tpu.memory_space<vmem>>, vector<2x1x32xf32>
    tpu.vector_store %arg7[%c0_21, %c1, %c0_22], %70 {strides = array<i32>} : memref<2x8x32xf32, #tpu.memory_space<vmem>>, vector<2x1x32xf32>,
    %72 = arith.truncf %69 : vector<2x32xf32> to vector<2x32xbf16>
    %cst_23 = arith.constant dense<0.000000e+00> : vector<2x96xf32>
    %73 = tpu.matmul %72, %12, %cst_23 {dimension_numbers = #tpu.dot_dimension_numbers<[1], [0], [0], [1], [0, 0, 1, 1], [], []>} : vector<2x32xbf16>, vector<32x96xbf16>, vector<2x96xf32> -> vector<2x96xf32>
    %74 = vector.broadcast %13 : vector<1x96xf32> to vector<2x96xf32>
    %75 = arith.addf %73, %74 : vector<2x96xf32>
    %76 = vector.extract_strided_slice %8 {offsets = [0, 2, 0], sizes = [2, 1, 96], strides = [1, 1, 1]} : vector<2x8x96xf32> to vector<2x1x96xf32>
    %77 = vector.shape_cast %76 : vector<2x1x96xf32> to vector<2x96xf32>
    %78 = vector.extract_strided_slice %77 {offsets = [0, 0], sizes = [2, 64], strides = [1, 1]} : vector<2x96xf32> to vector<2x64xf32>
    %79 = vector.extract_strided_slice %75 {offsets = [0, 0], sizes = [2, 64], strides = [1, 1]} : vector<2x96xf32> to vector<2x64xf32>
    %80 = arith.addf %78, %79 : vector<2x64xf32>
    %81 = arith.negf %80 : vector<2x64xf32>
    %82 = math.exp %81 : vector<2x64xf32>
    %cst_24 = arith.constant 1.000000e+00 : f32
    %83 = vector.broadcast %cst_24 : f32 to vector<2x64xf32>
    %84 = arith.addf %83, %82 : vector<2x64xf32>
    %85 = arith.divf %83, %84 : vector<2x64xf32>
    %86 = vector.extract_strided_slice %85 {offsets = [0, 0], sizes = [2, 32], strides = [1, 1]} : vector<2x64xf32> to vector<2x32xf32>
    %87 = vector.extract_strided_slice %85 {offsets = [0, 32], sizes = [2, 32], strides = [1, 1]} : vector<2x64xf32> to vector<2x32xf32>
    %88 = vector.extract_strided_slice %77 {offsets = [0, 64], sizes = [2, 32], strides = [1, 1]} : vector<2x96xf32> to vector<2x32xf32>
    %89 = vector.extract_strided_slice %75 {offsets = [0, 64], sizes = [2, 32], strides = [1, 1]} : vector<2x96xf32> to vector<2x32xf32>
    %90 = arith.mulf %86, %89 : vector<2x32xf32>
    %91 = arith.addf %88, %90 : vector<2x32xf32>
    %92 = math.tanh %91 : vector<2x32xf32>
    %cst_25 = arith.constant 1.000000e+00 : f32
    %93 = vector.broadcast %cst_25 : f32 to vector<2x32xf32>
    %94 = arith.subf %93, %87 : vector<2x32xf32>
    %95 = arith.mulf %94, %92 : vector<2x32xf32>
    %96 = arith.mulf %87, %69 : vector<2x32xf32>
    %97 = arith.addf %95, %96 : vector<2x32xf32>
    %98 = vector.shape_cast %97 : vector<2x32xf32> to vector<2x1x32xf32>
    %c0_26 = arith.constant 0 : index
    %c2 = arith.constant 2 : index
    %c0_27 = arith.constant 0 : index
    %99 = vector.load %arg7[%c0_26, %c2, %c0_27] : memref<2x8x32xf32, #tpu.memory_space<vmem>>, vector<2x1x32xf32>
    tpu.vector_store %arg7[%c0_26, %c2, %c0_27], %98 {strides = array<i32>} : memref<2x8x32xf32, #tpu.memory_space<vmem>>, vector<2x1x32xf32>,
    %100 = arith.truncf %97 : vector<2x32xf32> to vector<2x32xbf16>
    %cst_28 = arith.constant dense<0.000000e+00> : vector<2x96xf32>
    %101 = tpu.matmul %100, %12, %cst_28 {dimension_numbers = #tpu.dot_dimension_numbers<[1], [0], [0], [1], [0, 0, 1, 1], [], []>} : vector<2x32xbf16>, vector<32x96xbf16>, vector<2x96xf32> -> vector<2x96xf32>
    %102 = vector.broadcast %13 : vector<1x96xf32> to vector<2x96xf32>
    %103 = arith.addf %101, %102 : vector<2x96xf32>
    %104 = vector.extract_strided_slice %8 {offsets = [0, 3, 0], sizes = [2, 1, 96], strides = [1, 1, 1]} : vector<2x8x96xf32> to vector<2x1x96xf32>
    %105 = vector.shape_cast %104 : vector<2x1x96xf32> to vector<2x96xf32>
    %106 = vector.extract_strided_slice %105 {offsets = [0, 0], sizes = [2, 64], strides = [1, 1]} : vector<2x96xf32> to vector<2x64xf32>
    %107 = vector.extract_strided_slice %103 {offsets = [0, 0], sizes = [2, 64], strides = [1, 1]} : vector<2x96xf32> to vector<2x64xf32>
    %108 = arith.addf %106, %107 : vector<2x64xf32>
    %109 = arith.negf %108 : vector<2x64xf32>
    %110 = math.exp %109 : vector<2x64xf32>
    %cst_29 = arith.constant 1.000000e+00 : f32
    %111 = vector.broadcast %cst_29 : f32 to vector<2x64xf32>
    %112 = arith.addf %111, %110 : vector<2x64xf32>
    %113 = arith.divf %111, %112 : vector<2x64xf32>
    %114 = vector.extract_strided_slice %113 {offsets = [0, 0], sizes = [2, 32], strides = [1, 1]} : vector<2x64xf32> to vector<2x32xf32>
    %115 = vector.extract_strided_slice %113 {offsets = [0, 32], sizes = [2, 32], strides = [1, 1]} : vector<2x64xf32> to vector<2x32xf32>
    %116 = vector.extract_strided_slice %105 {offsets = [0, 64], sizes = [2, 32], strides = [1, 1]} : vector<2x96xf32> to vector<2x32xf32>
    %117 = vector.extract_strided_slice %103 {offsets = [0, 64], sizes = [2, 32], strides = [1, 1]} : vector<2x96xf32> to vector<2x32xf32>
    %118 = arith.mulf %114, %117 : vector<2x32xf32>
    %119 = arith.addf %116, %118 : vector<2x32xf32>
    %120 = math.tanh %119 : vector<2x32xf32>
    %cst_30 = arith.constant 1.000000e+00 : f32
    %121 = vector.broadcast %cst_30 : f32 to vector<2x32xf32>
    %122 = arith.subf %121, %115 : vector<2x32xf32>
    %123 = arith.mulf %122, %120 : vector<2x32xf32>
    %124 = arith.mulf %115, %97 : vector<2x32xf32>
    %125 = arith.addf %123, %124 : vector<2x32xf32>
    %126 = vector.shape_cast %125 : vector<2x32xf32> to vector<2x1x32xf32>
    %c0_31 = arith.constant 0 : index
    %c3 = arith.constant 3 : index
    %c0_32 = arith.constant 0 : index
    %127 = vector.load %arg7[%c0_31, %c3, %c0_32] : memref<2x8x32xf32, #tpu.memory_space<vmem>>, vector<2x1x32xf32>
    tpu.vector_store %arg7[%c0_31, %c3, %c0_32], %126 {strides = array<i32>} : memref<2x8x32xf32, #tpu.memory_space<vmem>>, vector<2x1x32xf32>,
    %128 = arith.truncf %125 : vector<2x32xf32> to vector<2x32xbf16>
    %cst_33 = arith.constant dense<0.000000e+00> : vector<2x96xf32>
    %129 = tpu.matmul %128, %12, %cst_33 {dimension_numbers = #tpu.dot_dimension_numbers<[1], [0], [0], [1], [0, 0, 1, 1], [], []>} : vector<2x32xbf16>, vector<32x96xbf16>, vector<2x96xf32> -> vector<2x96xf32>
    %130 = vector.broadcast %13 : vector<1x96xf32> to vector<2x96xf32>
    %131 = arith.addf %129, %130 : vector<2x96xf32>
    %132 = vector.extract_strided_slice %8 {offsets = [0, 4, 0], sizes = [2, 1, 96], strides = [1, 1, 1]} : vector<2x8x96xf32> to vector<2x1x96xf32>
    %133 = vector.shape_cast %132 : vector<2x1x96xf32> to vector<2x96xf32>
    %134 = vector.extract_strided_slice %133 {offsets = [0, 0], sizes = [2, 64], strides = [1, 1]} : vector<2x96xf32> to vector<2x64xf32>
    %135 = vector.extract_strided_slice %131 {offsets = [0, 0], sizes = [2, 64], strides = [1, 1]} : vector<2x96xf32> to vector<2x64xf32>
    %136 = arith.addf %134, %135 : vector<2x64xf32>
    %137 = arith.negf %136 : vector<2x64xf32>
    %138 = math.exp %137 : vector<2x64xf32>
    %cst_34 = arith.constant 1.000000e+00 : f32
    %139 = vector.broadcast %cst_34 : f32 to vector<2x64xf32>
    %140 = arith.addf %139, %138 : vector<2x64xf32>
    %141 = arith.divf %139, %140 : vector<2x64xf32>
    %142 = vector.extract_strided_slice %141 {offsets = [0, 0], sizes = [2, 32], strides = [1, 1]} : vector<2x64xf32> to vector<2x32xf32>
    %143 = vector.extract_strided_slice %141 {offsets = [0, 32], sizes = [2, 32], strides = [1, 1]} : vector<2x64xf32> to vector<2x32xf32>
    %144 = vector.extract_strided_slice %133 {offsets = [0, 64], sizes = [2, 32], strides = [1, 1]} : vector<2x96xf32> to vector<2x32xf32>
    %145 = vector.extract_strided_slice %131 {offsets = [0, 64], sizes = [2, 32], strides = [1, 1]} : vector<2x96xf32> to vector<2x32xf32>
    %146 = arith.mulf %142, %145 : vector<2x32xf32>
    %147 = arith.addf %144, %146 : vector<2x32xf32>
    %148 = math.tanh %147 : vector<2x32xf32>
    %cst_35 = arith.constant 1.000000e+00 : f32
    %149 = vector.broadcast %cst_35 : f32 to vector<2x32xf32>
    %150 = arith.subf %149, %143 : vector<2x32xf32>
    %151 = arith.mulf %150, %148 : vector<2x32xf32>
    %152 = arith.mulf %143, %125 : vector<2x32xf32>
    %153 = arith.addf %151, %152 : vector<2x32xf32>
    %154 = vector.shape_cast %153 : vector<2x32xf32> to vector<2x1x32xf32>
    %c0_36 = arith.constant 0 : index
    %c4 = arith.constant 4 : index
    %c0_37 = arith.constant 0 : index
    %155 = vector.load %arg7[%c0_36, %c4, %c0_37] : memref<2x8x32xf32, #tpu.memory_space<vmem>>, vector<2x1x32xf32>
    tpu.vector_store %arg7[%c0_36, %c4, %c0_37], %154 {strides = array<i32>} : memref<2x8x32xf32, #tpu.memory_space<vmem>>, vector<2x1x32xf32>,
    %156 = arith.truncf %153 : vector<2x32xf32> to vector<2x32xbf16>
    %cst_38 = arith.constant dense<0.000000e+00> : vector<2x96xf32>
    %157 = tpu.matmul %156, %12, %cst_38 {dimension_numbers = #tpu.dot_dimension_numbers<[1], [0], [0], [1], [0, 0, 1, 1], [], []>} : vector<2x32xbf16>, vector<32x96xbf16>, vector<2x96xf32> -> vector<2x96xf32>
    %158 = vector.broadcast %13 : vector<1x96xf32> to vector<2x96xf32>
    %159 = arith.addf %157, %158 : vector<2x96xf32>
    %160 = vector.extract_strided_slice %8 {offsets = [0, 5, 0], sizes = [2, 1, 96], strides = [1, 1, 1]} : vector<2x8x96xf32> to vector<2x1x96xf32>
    %161 = vector.shape_cast %160 : vector<2x1x96xf32> to vector<2x96xf32>
    %162 = vector.extract_strided_slice %161 {offsets = [0, 0], sizes = [2, 64], strides = [1, 1]} : vector<2x96xf32> to vector<2x64xf32>
    %163 = vector.extract_strided_slice %159 {offsets = [0, 0], sizes = [2, 64], strides = [1, 1]} : vector<2x96xf32> to vector<2x64xf32>
    %164 = arith.addf %162, %163 : vector<2x64xf32>
    %165 = arith.negf %164 : vector<2x64xf32>
    %166 = math.exp %165 : vector<2x64xf32>
    %cst_39 = arith.constant 1.000000e+00 : f32
    %167 = vector.broadcast %cst_39 : f32 to vector<2x64xf32>
    %168 = arith.addf %167, %166 : vector<2x64xf32>
    %169 = arith.divf %167, %168 : vector<2x64xf32>
    %170 = vector.extract_strided_slice %169 {offsets = [0, 0], sizes = [2, 32], strides = [1, 1]} : vector<2x64xf32> to vector<2x32xf32>
    %171 = vector.extract_strided_slice %169 {offsets = [0, 32], sizes = [2, 32], strides = [1, 1]} : vector<2x64xf32> to vector<2x32xf32>
    %172 = vector.extract_strided_slice %161 {offsets = [0, 64], sizes = [2, 32], strides = [1, 1]} : vector<2x96xf32> to vector<2x32xf32>
    %173 = vector.extract_strided_slice %159 {offsets = [0, 64], sizes = [2, 32], strides = [1, 1]} : vector<2x96xf32> to vector<2x32xf32>
    %174 = arith.mulf %170, %173 : vector<2x32xf32>
    %175 = arith.addf %172, %174 : vector<2x32xf32>
    %176 = math.tanh %175 : vector<2x32xf32>
    %cst_40 = arith.constant 1.000000e+00 : f32
    %177 = vector.broadcast %cst_40 : f32 to vector<2x32xf32>
    %178 = arith.subf %177, %171 : vector<2x32xf32>
    %179 = arith.mulf %178, %176 : vector<2x32xf32>
    %180 = arith.mulf %171, %153 : vector<2x32xf32>
    %181 = arith.addf %179, %180 : vector<2x32xf32>
    %182 = vector.shape_cast %181 : vector<2x32xf32> to vector<2x1x32xf32>
    %c0_41 = arith.constant 0 : index
    %c5 = arith.constant 5 : index
    %c0_42 = arith.constant 0 : index
    %183 = vector.load %arg7[%c0_41, %c5, %c0_42] : memref<2x8x32xf32, #tpu.memory_space<vmem>>, vector<2x1x32xf32>
    tpu.vector_store %arg7[%c0_41, %c5, %c0_42], %182 {strides = array<i32>} : memref<2x8x32xf32, #tpu.memory_space<vmem>>, vector<2x1x32xf32>,
    %184 = arith.truncf %181 : vector<2x32xf32> to vector<2x32xbf16>
    %cst_43 = arith.constant dense<0.000000e+00> : vector<2x96xf32>
    %185 = tpu.matmul %184, %12, %cst_43 {dimension_numbers = #tpu.dot_dimension_numbers<[1], [0], [0], [1], [0, 0, 1, 1], [], []>} : vector<2x32xbf16>, vector<32x96xbf16>, vector<2x96xf32> -> vector<2x96xf32>
    %186 = vector.broadcast %13 : vector<1x96xf32> to vector<2x96xf32>
    %187 = arith.addf %185, %186 : vector<2x96xf32>
    %188 = vector.extract_strided_slice %8 {offsets = [0, 6, 0], sizes = [2, 1, 96], strides = [1, 1, 1]} : vector<2x8x96xf32> to vector<2x1x96xf32>
    %189 = vector.shape_cast %188 : vector<2x1x96xf32> to vector<2x96xf32>
    %190 = vector.extract_strided_slice %189 {offsets = [0, 0], sizes = [2, 64], strides = [1, 1]} : vector<2x96xf32> to vector<2x64xf32>
    %191 = vector.extract_strided_slice %187 {offsets = [0, 0], sizes = [2, 64], strides = [1, 1]} : vector<2x96xf32> to vector<2x64xf32>
    %192 = arith.addf %190, %191 : vector<2x64xf32>
    %193 = arith.negf %192 : vector<2x64xf32>
    %194 = math.exp %193 : vector<2x64xf32>
    %cst_44 = arith.constant 1.000000e+00 : f32
    %195 = vector.broadcast %cst_44 : f32 to vector<2x64xf32>
    %196 = arith.addf %195, %194 : vector<2x64xf32>
    %197 = arith.divf %195, %196 : vector<2x64xf32>
    %198 = vector.extract_strided_slice %197 {offsets = [0, 0], sizes = [2, 32], strides = [1, 1]} : vector<2x64xf32> to vector<2x32xf32>
    %199 = vector.extract_strided_slice %197 {offsets = [0, 32], sizes = [2, 32], strides = [1, 1]} : vector<2x64xf32> to vector<2x32xf32>
    %200 = vector.extract_strided_slice %189 {offsets = [0, 64], sizes = [2, 32], strides = [1, 1]} : vector<2x96xf32> to vector<2x32xf32>
    %201 = vector.extract_strided_slice %187 {offsets = [0, 64], sizes = [2, 32], strides = [1, 1]} : vector<2x96xf32> to vector<2x32xf32>
    %202 = arith.mulf %198, %201 : vector<2x32xf32>
    %203 = arith.addf %200, %202 : vector<2x32xf32>
    %204 = math.tanh %203 : vector<2x32xf32>
    %cst_45 = arith.constant 1.000000e+00 : f32
    %205 = vector.broadcast %cst_45 : f32 to vector<2x32xf32>
    %206 = arith.subf %205, %199 : vector<2x32xf32>
    %207 = arith.mulf %206, %204 : vector<2x32xf32>
    %208 = arith.mulf %199, %181 : vector<2x32xf32>
    %209 = arith.addf %207, %208 : vector<2x32xf32>
    %210 = vector.shape_cast %209 : vector<2x32xf32> to vector<2x1x32xf32>
    %c0_46 = arith.constant 0 : index
    %c6 = arith.constant 6 : index
    %c0_47 = arith.constant 0 : index
    %211 = vector.load %arg7[%c0_46, %c6, %c0_47] : memref<2x8x32xf32, #tpu.memory_space<vmem>>, vector<2x1x32xf32>
    tpu.vector_store %arg7[%c0_46, %c6, %c0_47], %210 {strides = array<i32>} : memref<2x8x32xf32, #tpu.memory_space<vmem>>, vector<2x1x32xf32>,
    %212 = arith.truncf %209 : vector<2x32xf32> to vector<2x32xbf16>
    %cst_48 = arith.constant dense<0.000000e+00> : vector<2x96xf32>
    %213 = tpu.matmul %212, %12, %cst_48 {dimension_numbers = #tpu.dot_dimension_numbers<[1], [0], [0], [1], [0, 0, 1, 1], [], []>} : vector<2x32xbf16>, vector<32x96xbf16>, vector<2x96xf32> -> vector<2x96xf32>
    %214 = vector.broadcast %13 : vector<1x96xf32> to vector<2x96xf32>
    %215 = arith.addf %213, %214 : vector<2x96xf32>
    %216 = vector.extract_strided_slice %8 {offsets = [0, 7, 0], sizes = [2, 1, 96], strides = [1, 1, 1]} : vector<2x8x96xf32> to vector<2x1x96xf32>
    %217 = vector.shape_cast %216 : vector<2x1x96xf32> to vector<2x96xf32>
    %218 = vector.extract_strided_slice %217 {offsets = [0, 0], sizes = [2, 64], strides = [1, 1]} : vector<2x96xf32> to vector<2x64xf32>
    %219 = vector.extract_strided_slice %215 {offsets = [0, 0], sizes = [2, 64], strides = [1, 1]} : vector<2x96xf32> to vector<2x64xf32>
    %220 = arith.addf %218, %219 : vector<2x64xf32>
    %221 = arith.negf %220 : vector<2x64xf32>
    %222 = math.exp %221 : vector<2x64xf32>
    %cst_49 = arith.constant 1.000000e+00 : f32
    %223 = vector.broadcast %cst_49 : f32 to vector<2x64xf32>
    %224 = arith.addf %223, %222 : vector<2x64xf32>
    %225 = arith.divf %223, %224 : vector<2x64xf32>
    %226 = vector.extract_strided_slice %225 {offsets = [0, 0], sizes = [2, 32], strides = [1, 1]} : vector<2x64xf32> to vector<2x32xf32>
    %227 = vector.extract_strided_slice %225 {offsets = [0, 32], sizes = [2, 32], strides = [1, 1]} : vector<2x64xf32> to vector<2x32xf32>
    %228 = vector.extract_strided_slice %217 {offsets = [0, 64], sizes = [2, 32], strides = [1, 1]} : vector<2x96xf32> to vector<2x32xf32>
    %229 = vector.extract_strided_slice %215 {offsets = [0, 64], sizes = [2, 32], strides = [1, 1]} : vector<2x96xf32> to vector<2x32xf32>
    %230 = arith.mulf %226, %229 : vector<2x32xf32>
    %231 = arith.addf %228, %230 : vector<2x32xf32>
    %232 = math.tanh %231 : vector<2x32xf32>
    %cst_50 = arith.constant 1.000000e+00 : f32
    %233 = vector.broadcast %cst_50 : f32 to vector<2x32xf32>
    %234 = arith.subf %233, %227 : vector<2x32xf32>
    %235 = arith.mulf %234, %232 : vector<2x32xf32>
    %236 = arith.mulf %227, %209 : vector<2x32xf32>
    %237 = arith.addf %235, %236 : vector<2x32xf32>
    %238 = vector.shape_cast %237 : vector<2x32xf32> to vector<2x1x32xf32>
    %c0_51 = arith.constant 0 : index
    %c7 = arith.constant 7 : index
    %c0_52 = arith.constant 0 : index
    %239 = vector.load %arg7[%c0_51, %c7, %c0_52] : memref<2x8x32xf32, #tpu.memory_space<vmem>>, vector<2x1x32xf32>
    tpu.vector_store %arg7[%c0_51, %c7, %c0_52], %238 {strides = array<i32>} : memref<2x8x32xf32, #tpu.memory_space<vmem>>, vector<2x1x32xf32>,
    %c0_53 = arith.constant 0 : index
    %c0_54 = arith.constant 0 : index
    %c0_55 = arith.constant 0 : index
    %240 = vector.load %arg7[%c0_53, %c0_54, %c0_55] : memref<2x8x32xf32, #tpu.memory_space<vmem>>, vector<2x8x32xf32>
    %241 = vector.shape_cast %240 : vector<2x8x32xf32> to vector<16x32xf32>
    %c0_56 = arith.constant 0 : index
    %c0_57 = arith.constant 0 : index
    %c0_58 = arith.constant 0 : index
    %242 = vector.load %arg3[%c0_56, %c0_57, %c0_58] : memref<2x1x32xf32, #tpu.memory_space<vmem>>, vector<2x1x32xf32>
    %243 = vector.shape_cast %242 : vector<2x1x32xf32> to vector<2x32xf32>
    %244 = arith.truncf %243 : vector<2x32xf32> to vector<2x32xbf16>
    %245 = arith.truncf %241 : vector<16x32xf32> to vector<16x32xbf16>
    %c104 = arith.constant 104 : index
    %c0_59 = arith.constant 0 : index
    %246 = vector.load %arg4[%c104, %c0_59] : memref<352x128xbf16, #tpu.memory_space<vmem>>, vector<32x32xbf16>
    %cst_60 = arith.constant dense<0.000000e+00> : vector<2x32xf32>
    %247 = tpu.matmul %244, %246, %cst_60 {dimension_numbers = #tpu.dot_dimension_numbers<[1], [0], [0], [1], [0, 0, 1, 1], [], []>} : vector<2x32xbf16>, vector<32x32xbf16>, vector<2x32xf32> -> vector<2x32xf32>
    %c16 = arith.constant 16 : index
    %c0_61 = arith.constant 0 : index
    %248 = vector.load %arg5[%c16, %c0_61] : memref<88x128xf32, #tpu.memory_space<vmem>>, vector<1x32xf32>
    %249 = vector.broadcast %248 : vector<1x32xf32> to vector<2x32xf32>
    %250 = arith.addf %247, %249 : vector<2x32xf32>
    %251 = vector.shape_cast %250 : vector<2x32xf32> to vector<2x1x32xf32>
    %252 = vector.shape_cast %251 : vector<2x1x32xf32> to vector<2x1x32xf32>
    %253 = vector.broadcast %252 : vector<2x1x32xf32> to vector<2x8x32xf32>
    %254 = vector.shape_cast %253 : vector<2x8x32xf32> to vector<16x32xf32>
    %c136 = arith.constant 136 : index
    %c0_62 = arith.constant 0 : index
    %255 = vector.load %arg4[%c136, %c0_62] : memref<352x128xbf16, #tpu.memory_space<vmem>>, vector<32x64xbf16>
    %cst_63 = arith.constant dense<0.000000e+00> : vector<16x64xf32>
    %256 = tpu.matmul %245, %255, %cst_63 {dimension_numbers = #tpu.dot_dimension_numbers<[1], [0], [0], [1], [0, 0, 1, 1], [], []>} : vector<16x32xbf16>, vector<32x64xbf16>, vector<16x64xf32> -> vector<16x64xf32>
    %c24 = arith.constant 24 : index
    %c0_64 = arith.constant 0 : index
    %257 = vector.load %arg5[%c24, %c0_64] : memref<88x128xf32, #tpu.memory_space<vmem>>, vector<1x64xf32>
    %258 = vector.broadcast %257 : vector<1x64xf32> to vector<16x64xf32>
    %259 = arith.addf %256, %258 : vector<16x64xf32>
    %cst_65 = arith.constant 0.000000e+00 : f32
    %260 = vector.broadcast %cst_65 : f32 to vector<16x16xf32>
    %261 = tpu.iota {dimensions = array<i32: 0>} : vector<16x16xi32>
    %c8_i32 = arith.constant 8 : i32
    %c0_i32 = arith.constant 0 : i32
    %262 = arith.cmpi eq, %c8_i32, %c0_i32 : i32
    %c1_i32 = arith.constant 1 : i32
    %263 = arith.select %262, %c1_i32, %c8_i32 : i32
    %264 = vector.broadcast %263 : i32 to vector<16x16xi32>
    %265 = arith.remsi %261, %264 : vector<16x16xi32>
    %c0_i32_66 = arith.constant 0 : i32
    %266 = vector.broadcast %c0_i32_66 : i32 to vector<16x16xi32>
    %267 = arith.cmpi ne, %265, %266 : vector<16x16xi32>
    %c0_i32_67 = arith.constant 0 : i32
    %268 = vector.broadcast %c0_i32_67 : i32 to vector<16x16xi32>
    %269 = arith.cmpi slt, %265, %268 : vector<16x16xi32>
    %c0_i32_68 = arith.constant 0 : i32
    %270 = arith.cmpi slt, %263, %c0_i32_68 : i32
    %271 = vector.broadcast %270 : i1 to vector<16x16xi1>
    %272 = vector.broadcast %271 : vector<16x16xi1> to vector<16x16xi1>
    %273 = arith.xori %269, %272 : vector<16x16xi1>
    %274 = arith.andi %273, %267 : vector<16x16xi1>
    %275 = vector.broadcast %263 : i32 to vector<16x16xi32>
    %276 = arith.addi %265, %275 : vector<16x16xi32>
    %277 = arith.select %274, %276, %265 : vector<16x16xi1>, vector<16x16xi32>
    %278 = vector.extract_strided_slice %254 {offsets = [0, 0], sizes = [16, 16], strides = [1, 1]} : vector<16x32xf32> to vector<16x16xf32>
    %279 = arith.addf %11, %278 : vector<16x16xf32>
    %c1_i32_69 = arith.constant 1 : i32
    %280 = vector.broadcast %c1_i32_69 : i32 to vector<16x16xi32>
    %281 = arith.cmpi sge, %277, %280 : vector<16x16xi32>
    %c1_i32_70 = arith.constant 1 : i32
    %282 = tpu.dynamic_rotate %279 by %c1_i32_70 dim 0 : vector<16x16xf32>, i32 -> vector<16x16xf32>
    %cst_71 = arith.constant 0.000000e+00 : f32
    %283 = vector.broadcast %cst_71 : f32 to vector<16x16xf32>
    %284 = arith.select %281, %282, %283 : vector<16x16xi1>, vector<16x16xf32>
    %c7_i32 = arith.constant 7 : i32
    %285 = vector.broadcast %c7_i32 : i32 to vector<16x16xi32>
    %286 = arith.cmpi slt, %277, %285 : vector<16x16xi32>
    %c15_i32 = arith.constant 15 : i32
    %287 = tpu.dynamic_rotate %279 by %c15_i32 dim 0 : vector<16x16xf32>, i32 -> vector<16x16xf32>
    %cst_72 = arith.constant 0.000000e+00 : f32
    %288 = vector.broadcast %cst_72 : f32 to vector<16x16xf32>
    %289 = arith.select %286, %287, %288 : vector<16x16xi1>, vector<16x16xf32>
    %290 = tpu.concatenate %284, %279, %289 in 1 : vector<16x16xf32>, vector<16x16xf32>, vector<16x16xf32> -> vector<16x48xf32>
    %291 = arith.truncf %290 : vector<16x48xf32> to vector<16x48xbf16>
    %c168 = arith.constant 168 : index
    %c0_73 = arith.constant 0 : index
    %292 = vector.load %arg4[%c168, %c0_73] : memref<352x128xbf16, #tpu.memory_space<vmem>>, vector<48x32xbf16>
    %cst_74 = arith.constant dense<0.000000e+00> : vector<16x32xf32>
    %293 = tpu.matmul %291, %292, %cst_74 {dimension_numbers = #tpu.dot_dimension_numbers<[1], [0], [0], [1], [0, 0, 1, 1], [], []>} : vector<16x48xbf16>, vector<48x32xbf16>, vector<16x32xf32> -> vector<16x32xf32>
    %c32 = arith.constant 32 : index
    %c0_75 = arith.constant 0 : index
    %294 = vector.load %arg5[%c32, %c0_75] : memref<88x128xf32, #tpu.memory_space<vmem>>, vector<1x32xf32>
    %295 = vector.broadcast %294 : vector<1x32xf32> to vector<16x32xf32>
    %296 = arith.addf %293, %295 : vector<16x32xf32>
    %297 = vector.extract_strided_slice %259 {offsets = [0, 0], sizes = [16, 32], strides = [1, 1]} : vector<16x64xf32> to vector<16x32xf32>
    %298 = arith.addf %296, %297 : vector<16x32xf32>
    %299 = vector.extract_strided_slice %298 {offsets = [0, 0], sizes = [16, 16], strides = [1, 1]} : vector<16x32xf32> to vector<16x16xf32>
    %300 = math.tanh %299 : vector<16x16xf32>
    %301 = vector.extract_strided_slice %298 {offsets = [0, 16], sizes = [16, 16], strides = [1, 1]} : vector<16x32xf32> to vector<16x16xf32>
    %302 = arith.negf %301 : vector<16x16xf32>
    %303 = math.exp %302 : vector<16x16xf32>
    %cst_76 = arith.constant 1.000000e+00 : f32
    %304 = vector.broadcast %cst_76 : f32 to vector<16x16xf32>
    %305 = arith.addf %304, %303 : vector<16x16xf32>
    %306 = arith.divf %304, %305 : vector<16x16xf32>
    %307 = arith.mulf %300, %306 : vector<16x16xf32>
    %308 = arith.truncf %307 : vector<16x16xf32> to vector<16x16xbf16>
    %c216 = arith.constant 216 : index
    %c0_77 = arith.constant 0 : index
    %309 = vector.load %arg4[%c216, %c0_77] : memref<352x128xbf16, #tpu.memory_space<vmem>>, vector<16x32xbf16>
    %cst_78 = arith.constant dense<0.000000e+00> : vector<16x32xf32>
    %310 = tpu.matmul %308, %309, %cst_78 {dimension_numbers = #tpu.dot_dimension_numbers<[1], [0], [0], [1], [0, 0, 1, 1], [], []>} : vector<16x16xbf16>, vector<16x32xbf16>, vector<16x32xf32> -> vector<16x32xf32>
    %c40 = arith.constant 40 : index
    %c0_79 = arith.constant 0 : index
    %311 = vector.load %arg5[%c40, %c0_79] : memref<88x128xf32, #tpu.memory_space<vmem>>, vector<1x32xf32>
    %312 = vector.broadcast %311 : vector<1x32xf32> to vector<16x32xf32>
    %313 = arith.addf %310, %312 : vector<16x32xf32>
    %314 = vector.extract_strided_slice %313 {offsets = [0, 0], sizes = [16, 16], strides = [1, 1]} : vector<16x32xf32> to vector<16x16xf32>
    %315 = arith.addf %11, %314 : vector<16x16xf32>
    %cst_80 = arith.constant 0.707106769 : f32
    %316 = vector.broadcast %cst_80 : f32 to vector<16x16xf32>
    %317 = arith.mulf %315, %316 : vector<16x16xf32>
    %318 = vector.extract_strided_slice %313 {offsets = [0, 16], sizes = [16, 16], strides = [1, 1]} : vector<16x32xf32> to vector<16x16xf32>
    %319 = arith.addf %260, %318 : vector<16x16xf32>
    %320 = vector.extract_strided_slice %254 {offsets = [0, 16], sizes = [16, 16], strides = [1, 1]} : vector<16x32xf32> to vector<16x16xf32>
    %321 = arith.addf %317, %320 : vector<16x16xf32>
    %c2_i32 = arith.constant 2 : i32
    %322 = vector.broadcast %c2_i32 : i32 to vector<16x16xi32>
    %323 = arith.cmpi sge, %277, %322 : vector<16x16xi32>
    %c2_i32_81 = arith.constant 2 : i32
    %324 = tpu.dynamic_rotate %321 by %c2_i32_81 dim 0 : vector<16x16xf32>, i32 -> vector<16x16xf32>
    %cst_82 = arith.constant 0.000000e+00 : f32
    %325 = vector.broadcast %cst_82 : f32 to vector<16x16xf32>
    %326 = arith.select %323, %324, %325 : vector<16x16xi1>, vector<16x16xf32>
    %c6_i32 = arith.constant 6 : i32
    %327 = vector.broadcast %c6_i32 : i32 to vector<16x16xi32>
    %328 = arith.cmpi slt, %277, %327 : vector<16x16xi32>
    %c14_i32 = arith.constant 14 : i32
    %329 = tpu.dynamic_rotate %321 by %c14_i32 dim 0 : vector<16x16xf32>, i32 -> vector<16x16xf32>
    %cst_83 = arith.constant 0.000000e+00 : f32
    %330 = vector.broadcast %cst_83 : f32 to vector<16x16xf32>
    %331 = arith.select %328, %329, %330 : vector<16x16xi1>, vector<16x16xf32>
    %332 = tpu.concatenate %326, %321, %331 in 1 : vector<16x16xf32>, vector<16x16xf32>, vector<16x16xf32> -> vector<16x48xf32>
    %333 = arith.truncf %332 : vector<16x48xf32> to vector<16x48xbf16>
    %c232 = arith.constant 232 : index
    %c0_84 = arith.constant 0 : index
    %334 = vector.load %arg4[%c232, %c0_84] : memref<352x128xbf16, #tpu.memory_space<vmem>>, vector<48x32xbf16>
    %cst_85 = arith.constant dense<0.000000e+00> : vector<16x32xf32>
    %335 = tpu.matmul %333, %334, %cst_85 {dimension_numbers = #tpu.dot_dimension_numbers<[1], [0], [0], [1], [0, 0, 1, 1], [], []>} : vector<16x48xbf16>, vector<48x32xbf16>, vector<16x32xf32> -> vector<16x32xf32>
    %c48 = arith.constant 48 : index
    %c0_86 = arith.constant 0 : index
    %336 = vector.load %arg5[%c48, %c0_86] : memref<88x128xf32, #tpu.memory_space<vmem>>, vector<1x32xf32>
    %337 = vector.broadcast %336 : vector<1x32xf32> to vector<16x32xf32>
    %338 = arith.addf %335, %337 : vector<16x32xf32>
    %339 = vector.extract_strided_slice %259 {offsets = [0, 32], sizes = [16, 32], strides = [1, 1]} : vector<16x64xf32> to vector<16x32xf32>
    %340 = arith.addf %338, %339 : vector<16x32xf32>
    %341 = vector.extract_strided_slice %340 {offsets = [0, 0], sizes = [16, 16], strides = [1, 1]} : vector<16x32xf32> to vector<16x16xf32>
    %342 = math.tanh %341 : vector<16x16xf32>
    %343 = vector.extract_strided_slice %340 {offsets = [0, 16], sizes = [16, 16], strides = [1, 1]} : vector<16x32xf32> to vector<16x16xf32>
    %344 = arith.negf %343 : vector<16x16xf32>
    %345 = math.exp %344 : vector<16x16xf32>
    %cst_87 = arith.constant 1.000000e+00 : f32
    %346 = vector.broadcast %cst_87 : f32 to vector<16x16xf32>
    %347 = arith.addf %346, %345 : vector<16x16xf32>
    %348 = arith.divf %346, %347 : vector<16x16xf32>
    %349 = arith.mulf %342, %348 : vector<16x16xf32>
    %350 = arith.truncf %349 : vector<16x16xf32> to vector<16x16xbf16>
    %c280 = arith.constant 280 : index
    %c0_88 = arith.constant 0 : index
    %351 = vector.load %arg4[%c280, %c0_88] : memref<352x128xbf16, #tpu.memory_space<vmem>>, vector<16x32xbf16>
    %cst_89 = arith.constant dense<0.000000e+00> : vector<16x32xf32>
    %352 = tpu.matmul %350, %351, %cst_89 {dimension_numbers = #tpu.dot_dimension_numbers<[1], [0], [0], [1], [0, 0, 1, 1], [], []>} : vector<16x16xbf16>, vector<16x32xbf16>, vector<16x32xf32> -> vector<16x32xf32>
    %c56 = arith.constant 56 : index
    %c0_90 = arith.constant 0 : index
    %353 = vector.load %arg5[%c56, %c0_90] : memref<88x128xf32, #tpu.memory_space<vmem>>, vector<1x32xf32>
    %354 = vector.broadcast %353 : vector<1x32xf32> to vector<16x32xf32>
    %355 = arith.addf %352, %354 : vector<16x32xf32>
    %356 = vector.extract_strided_slice %355 {offsets = [0, 16], sizes = [16, 16], strides = [1, 1]} : vector<16x32xf32> to vector<16x16xf32>
    %357 = arith.addf %319, %356 : vector<16x16xf32>
    %cst_91 = arith.constant 0.707106769 : f32
    %358 = vector.broadcast %cst_91 : f32 to vector<16x16xf32>
    %359 = arith.mulf %357, %358 : vector<16x16xf32>
    %cst_92 = arith.constant 0.000000e+00 : f32
    %360 = vector.broadcast %cst_92 : f32 to vector<16x16xf32>
    %361 = arith.maximumf %359, %360 : vector<16x16xf32>
    %362 = arith.truncf %361 : vector<16x16xf32> to vector<16x16xbf16>
    %c296 = arith.constant 296 : index
    %c0_93 = arith.constant 0 : index
    %363 = vector.load %arg4[%c296, %c0_93] : memref<352x128xbf16, #tpu.memory_space<vmem>>, vector<16x32xbf16>
    %cst_94 = arith.constant dense<0.000000e+00> : vector<16x32xf32>
    %364 = tpu.matmul %362, %363, %cst_94 {dimension_numbers = #tpu.dot_dimension_numbers<[1], [0], [0], [1], [0, 0, 1, 1], [], []>} : vector<16x16xbf16>, vector<16x32xbf16>, vector<16x32xf32> -> vector<16x32xf32>
    %c64 = arith.constant 64 : index
    %c0_95 = arith.constant 0 : index
    %365 = vector.load %arg5[%c64, %c0_95] : memref<88x128xf32, #tpu.memory_space<vmem>>, vector<1x32xf32>
    %366 = vector.broadcast %365 : vector<1x32xf32> to vector<16x32xf32>
    %367 = arith.addf %364, %366 : vector<16x32xf32>
    %368 = arith.addf %367, %241 : vector<16x32xf32>
    %369 = arith.truncf %368 : vector<16x32xf32> to vector<16x32xbf16>
    %c312 = arith.constant 312 : index
    %c0_96 = arith.constant 0 : index
    %370 = vector.load %arg4[%c312, %c0_96] : memref<352x128xbf16, #tpu.memory_space<vmem>>, vector<32x64xbf16>
    %cst_97 = arith.constant dense<0.000000e+00> : vector<16x64xf32>
    %371 = tpu.matmul %369, %370, %cst_97 {dimension_numbers = #tpu.dot_dimension_numbers<[1], [0], [0], [1], [0, 0, 1, 1], [], []>} : vector<16x32xbf16>, vector<32x64xbf16>, vector<16x64xf32> -> vector<16x64xf32>
    %c72_98 = arith.constant 72 : index
    %c0_99 = arith.constant 0 : index
    %372 = vector.load %arg5[%c72_98, %c0_99] : memref<88x128xf32, #tpu.memory_space<vmem>>, vector<1x64xf32>
    %373 = vector.broadcast %372 : vector<1x64xf32> to vector<16x64xf32>
    %374 = arith.addf %371, %373 : vector<16x64xf32>
    %375 = arith.mulf %374, %374 : vector<16x64xf32>
    %376 = arith.mulf %374, %375 : vector<16x64xf32>
    %cst_100 = arith.constant 4.471500e-02 : f32
    %377 = vector.broadcast %cst_100 : f32 to vector<16x64xf32>
    %378 = arith.mulf %377, %376 : vector<16x64xf32>
    %379 = arith.addf %374, %378 : vector<16x64xf32>
    %cst_101 = arith.constant 0.797884583 : f32
    %380 = vector.broadcast %cst_101 : f32 to vector<16x64xf32>
    %381 = arith.mulf %380, %379 : vector<16x64xf32>
    %382 = math.tanh %381 : vector<16x64xf32>
    %cst_102 = arith.constant 1.000000e+00 : f32
    %383 = vector.broadcast %cst_102 : f32 to vector<16x64xf32>
    %384 = arith.addf %383, %382 : vector<16x64xf32>
    %cst_103 = arith.constant 5.000000e-01 : f32
    %385 = vector.broadcast %cst_103 : f32 to vector<16x64xf32>
    %386 = arith.mulf %385, %384 : vector<16x64xf32>
    %387 = arith.mulf %374, %386 : vector<16x64xf32>
    %c344 = arith.constant 344 : index
    %c0_104 = arith.constant 0 : index
    %388 = vector.load %arg4[%c344, %c0_104] : memref<352x128xbf16, #tpu.memory_space<vmem>>, vector<1x64xbf16>
    %389 = arith.extf %388 : vector<1x64xbf16> to vector<1x64xf32>
    %390 = vector.broadcast %389 : vector<1x64xf32> to vector<16x64xf32>
    %391 = arith.mulf %387, %390 : vector<16x64xf32>
    %cst_105 = arith.constant dense<0.000000e+00> : vector<16xf32>
    %392 = vector.multi_reduction <add>, %391, %cst_105 [1] : vector<16x64xf32> to vector<16xf32>
    %393 = vector.shape_cast %392 : vector<16xf32> to vector<16x1xf32>
    %c80 = arith.constant 80 : index
    %c0_106 = arith.constant 0 : index
    %394 = vector.load %arg5[%c80, %c0_106] : memref<88x128xf32, #tpu.memory_space<vmem>>, vector<1x1xf32>
    %395 = vector.broadcast %394 : vector<1x1xf32> to vector<16x1xf32>
    %396 = arith.addf %393, %395 : vector<16x1xf32>
    %397 = vector.shape_cast %396 : vector<16x1xf32> to vector<2x8x1xf32>
    %c0_107 = arith.constant 0 : index
    %c0_108 = arith.constant 0 : index
    %c0_109 = arith.constant 0 : index
    %398 = vector.load %arg6[%c0_107, %c0_108, %c0_109] : memref<2x8x1xf32, #tpu.memory_space<vmem>>, vector<2x8x1xf32>
    tpu.vector_store %arg6[%c0_107, %c0_108, %c0_109], %397 {strides = array<i32>} : memref<2x8x1xf32, #tpu.memory_space<vmem>>, vector<2x8x1xf32>,
    return
  }
  func.func @transform_0(%arg0: i32) -> (i32, i32, i32) {
    %c0_i32 = arith.constant 0 : i32
    %c0_i32_0 = arith.constant 0 : i32
    %c0_i32_1 = arith.constant 0 : i32
    return %arg0, %c0_i32, %c0_i32_0 : i32, i32, i32
  }
  func.func @transform_1(%arg0: i32) -> (i32, i32, i32) {
    %c0_i32 = arith.constant 0 : i32
    %c0_i32_0 = arith.constant 0 : i32
    %c0_i32_1 = arith.constant 0 : i32
    return %arg0, %c0_i32, %c0_i32_0 : i32, i32, i32
  }
  func.func @transform_2(%arg0: i32) -> (i32, i32, i32) {
    %c0_i32 = arith.constant 0 : i32
    %c0_i32_0 = arith.constant 0 : i32
    %c0_i32_1 = arith.constant 0 : i32
    return %arg0, %c0_i32, %c0_i32_0 : i32, i32, i32
  }
  func.func @transform_3(%arg0: i32) -> (i32, i32) {
    %c0_i32 = arith.constant 0 : i32
    %c0_i32_0 = arith.constant 0 : i32
    %c0_i32_1 = arith.constant 0 : i32
    return %c0_i32, %c0_i32_0 : i32, i32
  }
  func.func @transform_4(%arg0: i32) -> (i32, i32) {
    %c0_i32 = arith.constant 0 : i32
    %c0_i32_0 = arith.constant 0 : i32
    %c0_i32_1 = arith.constant 0 : i32
    return %c0_i32, %c0_i32_0 : i32, i32
  }
  func.func @transform_5(%arg0: i32) -> (i32, i32, i32) {
    %c0_i32 = arith.constant 0 : i32
    %c0_i32_0 = arith.constant 0 : i32
    %c0_i32_1 = arith.constant 0 : i32
    return %arg0, %c0_i32, %c0_i32_0 : i32, i32, i32
  }
}

</mosaic_0001>

<llo_original>
// kernel: tpu_custom_call.1
$region0: #{tpu_custom_call.1}
  #allocation0 [shape = 'u32[]', space=smem, size = 0x4, offset = 0x4, fixed_abs, tag = 'smem constant byte address 0x4 - core index']
  #allocation1 [shape = 'u32[72,128]{1,0:T(1,128)}', space=vmem, size = 0x9000, scoped, tag = 'internal scratch']
  #allocation2 [shape = 'f32[2,8,32]{2,1,0:T(8,128)}', space=vmem, size = 0x2000, scoped, tag = 'scratch operand']
  %s0 = inlined_call_operand.hbm [shape: bf16[2,8,65], index: 0, kind: input, shape index: {}]
  %s1 = inlined_call_operand.hbm [shape: f32[2,1,32], index: 1, kind: input, shape index: {}]
  %s2 = inlined_call_operand.hbm [shape: f32[2,1,32], index: 2, kind: input, shape index: {}]
  %s3 = inlined_call_operand.hbm [shape: bf16[352,128], index: 3, kind: input, shape index: {}]
  %s4 = inlined_call_operand.hbm [shape: f32[88,128], index: 4, kind: input, shape index: {}]
  %s5 = inlined_call_operand.vmem [shape: f32[2,8,1], index: 5, kind: output, shape index: {}]
  %s6 = sld [smem:[#allocation0]]
  $region50: #{tpu_custom_call.1} parent=0
    _
  %s8 = ssub.s32 1, %s6
  %s9 = scalar_select 0, %s8, %s6
  $region1: #{tpu_custom_call.1} parent=0
    #allocation3 [shape = 'u8[4096]{0}', space=vmem, size = 0x1000, scoped, tag = 'input window, operand 0, single buffered']
    #allocation4 [shape = 's32[1]{0}', space=sflag, size = 0x4, scoped, tag = 'scoped memory for tpu_custom_call.1']
    #allocation5 [shape = 'u8[1024]{0}', space=vmem, size = 0x400, scoped, tag = 'input window, operand 1, single buffered']
    #allocation6 [shape = 's32[1]{0}', space=sflag, size = 0x4, scoped, tag = 'scoped memory for tpu_custom_call.1']
    #allocation7 [shape = 'u8[1024]{0}', space=vmem, size = 0x400, scoped, tag = 'input window, operand 2, single buffered']
    #allocation8 [shape = 'u8[90112]{0}', space=vmem, size = 0x16000, scoped, tag = 'input window, operand 3, single buffered']
    #allocation9 [shape = 's32[1]{0}', space=sflag, size = 0x4, scoped, tag = 'scoped memory for tpu_custom_call.1']
    #allocation10 [shape = 'u8[45056]{0}', space=vmem, size = 0xb000, scoped, tag = 'input window, operand 4, single buffered']
    %10 = vsyncpa [#allocation4], 0
    %11 = vsyncpa [#allocation6], 0
    %12 = vsyncpa [#allocation9], 0
    // Predicated region
    $region2: #{tpu_custom_call.1} parent=1 // pred_check
      _
    $region3: #{tpu_custom_call.1} parent=1 // pred_check_branch
      %14 = sbr.rel (0) target = $region5
    $region4: #{tpu_custom_call.1} parent=1 // pred_region
      %16 = vsyncadd [#allocation4], 0
      %s17 = sshll.u32 %s0, 4
      %s18 = int_to_ptr.hbm [resolvable:$true] %s17
      %s19 = sshll.u32 [#allocation3], 4
      %s20 = int_to_ptr.vmem [resolvable:$true] %s19
      %25 = dma.hbm_to_vmem [thread:$0]  %s18, 128, %s20, [#allocation4], 64, 64, 4
    $region5: #{tpu_custom_call.1} parent=1 // pred_fallthru
      _
    // Predicated region
    $region6: #{tpu_custom_call.1} parent=1 // pred_check
      _
    $region7: #{tpu_custom_call.1} parent=1 // pred_check_branch
      %27 = sbr.rel (0) target = $region9
    $region8: #{tpu_custom_call.1} parent=1 // pred_region
      %29 = vsyncadd [#allocation6], 0
      %s30 = sshll.u32 %s1, 4
      %s31 = int_to_ptr.hbm [resolvable:$true] %s30
      %s32 = sshll.u32 [#allocation5], 4
      %s33 = int_to_ptr.vmem [resolvable:$true] %s32
      %38 = dma.hbm_to_vmem [thread:$0]  %s31, 32, %s33, [#allocation6], 16, 16, 1
    $region9: #{tpu_custom_call.1} parent=1 // pred_fallthru
      _
    // Predicated region
    $region10: #{tpu_custom_call.1} parent=1 // pred_check
      _
    $region11: #{tpu_custom_call.1} parent=1 // pred_check_branch
      %40 = sbr.rel (0) target = $region13
    $region12: #{tpu_custom_call.1} parent=1 // pred_region
      %42 = vsyncadd [#allocation6], 0
      %s43 = sshll.u32 %s2, 4
      %s44 = int_to_ptr.hbm [resolvable:$true] %s43
      %s45 = sshll.u32 [#allocation7], 4
      %s46 = int_to_ptr.vmem [resolvable:$true] %s45
      %51 = dma.hbm_to_vmem [thread:$0]  %s44, 32, %s46, [#allocation6], 16, 16, 1
    $region13: #{tpu_custom_call.1} parent=1 // pred_fallthru
      _
    // Predicated region
    $region14: #{tpu_custom_call.1} parent=1 // pred_check
      _
    $region15: #{tpu_custom_call.1} parent=1 // pred_check_branch
      %53 = sbr.rel (0) target = $region17
    $region16: #{tpu_custom_call.1} parent=1 // pred_region
      %55 = vsyncadd [#allocation9], 0
      %s56 = sshll.u32 %s3, 4
      %s57 = int_to_ptr.hbm [resolvable:$true] %s56
      %s58 = sshll.u32 [#allocation8], 4
      %s59 = int_to_ptr.vmem [resolvable:$true] %s58
      %64 = dma.hbm_to_vmem [thread:$0]  %s57, 2816, %s59, [#allocation9], 64, 64, 4
    $region17: #{tpu_custom_call.1} parent=1 // pred_fallthru
      _
    // Predicated region
    $region18: #{tpu_custom_call.1} parent=1 // pred_check
      _
    $region19: #{tpu_custom_call.1} parent=1 // pred_check_branch
      %66 = sbr.rel (0) target = $region21
    $region20: #{tpu_custom_call.1} parent=1 // pred_region
      %68 = vsyncadd [#allocation9], 0
      %s69 = sshll.u32 %s4, 4
      %s70 = int_to_ptr.hbm [resolvable:$true] %s69
      %s71 = sshll.u32 [#allocation10], 4
      %s72 = int_to_ptr.vmem [resolvable:$true] %s71
      %77 = dma.hbm_to_vmem [thread:$0]  %s70, 1408, %s72, [#allocation9], 128, 128, 8
    $region21: #{tpu_custom_call.1} parent=1 // pred_fallthru
      _
    // Predicated region
    $region22: #{tpu_custom_call.1} parent=1 // pred_check
      _
    $region23: #{tpu_custom_call.1} parent=1 // pred_check_branch
      %79 = sbr.rel (0) target = $region25
    $region24: #{tpu_custom_call.1} parent=1 // pred_region
      %81 = dma.done [#allocation4], 128
    $region25: #{tpu_custom_call.1} parent=1 // pred_fallthru
      _
    // Predicated region
    $region26: #{tpu_custom_call.1} parent=1 // pred_check
      _
    $region27: #{tpu_custom_call.1} parent=1 // pred_check_branch
      %83 = sbr.rel (0) target = $region29
    $region28: #{tpu_custom_call.1} parent=1 // pred_region
      %85 = dma.done [#allocation6], 32
    $region29: #{tpu_custom_call.1} parent=1 // pred_fallthru
      _
    // Predicated region
    $region30: #{tpu_custom_call.1} parent=1 // pred_check
      _
    $region31: #{tpu_custom_call.1} parent=1 // pred_check_branch
      %87 = sbr.rel (0) target = $region33
    $region32: #{tpu_custom_call.1} parent=1 // pred_region
      %89 = dma.done [#allocation6], 32
    $region33: #{tpu_custom_call.1} parent=1 // pred_fallthru
      _
    // Predicated region
    $region34: #{tpu_custom_call.1} parent=1 // pred_check
      _
    $region35: #{tpu_custom_call.1} parent=1 // pred_check_branch
      %91 = sbr.rel (0) target = $region37
    $region36: #{tpu_custom_call.1} parent=1 // pred_region
      %93 = dma.done [#allocation9], 2816
    $region37: #{tpu_custom_call.1} parent=1 // pred_fallthru
      _
    // Predicated region
    $region38: #{tpu_custom_call.1} parent=1 // pred_check
      _
    $region39: #{tpu_custom_call.1} parent=1 // pred_check_branch
      %95 = sbr.rel (0) target = $region41
    $region40: #{tpu_custom_call.1} parent=1 // pred_region
      %97 = dma.done [#allocation9], 1408
    $region41: #{tpu_custom_call.1} parent=1 // pred_fallthru
      _
    %v99 = vld [vmem:[#allocation3] sm:$0xf]
    %v100 = vld [vmem:[#allocation3 + $0x4] sm:$0xf]
    %v101 = vld [vmem:[#allocation8] sm:$0xf]
    %v102 = vld [vmem:[#allocation8 + $0x4] sm:$0xf]
    %v103 = vld [vmem:[#allocation8 + $0x8] sm:$0xf]
    %v104 = vld [vmem:[#allocation8 + $0xc] sm:$0xf]
    %v105 = vld [vmem:[#allocation8 + $0x10] sm:$0xf]
    %v106 = vld [vmem:[#allocation8 + $0x14] sm:$0xf]
    %v107 = vld [vmem:[#allocation8 + $0x18] sm:$0xf]
    %v108 = vld [vmem:[#allocation8 + $0x1c] sm:$0xf]
    %v109 = vld [vmem:[#allocation8 + $0x20] sm:$0x1]
    %v110 = vld [vmem:[#allocation10] sm:$0x1]
    %v111 = vperm.slane %v110, 0
    %v114 = vunpack.c.l.b16 %v99
    %v115 = vunpack.c.l.b16 %v100
    %v116 = vpack.c.b16 %v115, %v114
    %v126 = vunpack.c.l.b16 %v101
    %v127 = vunpack.c.l.b16 %v102
    %v128 = vunpack.c.l.b16 %v103
    %v129 = vunpack.c.l.b16 %v104
    %v130 = vunpack.c.l.b16 %v105
    %v131 = vunpack.c.l.b16 %v106
    %v132 = vunpack.c.l.b16 %v107
    %v133 = vunpack.c.l.b16 %v108
    %v134 = vunpack.c.l.b16 %v109
    %v135 = vpack.c.b16 %v127, %v126
    %v136 = vpack.c.b16 %v129, %v128
    %v137 = vpack.c.b16 %v131, %v130
    %v138 = vpack.c.b16 %v133, %v132
    %v139 = vpack.c.b16 %v134, %v134
    %vm144 = vcmask 531456
    %v146 = vsel %vm144, %v116, 0
    %vm148 = vcmask 1040384
    %v149 = vsel 0, 4294967295, 65535
    %v150 = vsel %vm148, %v149, 0
    %v152 = vand.u32 %v139, %v150
    %154 = vmatpush.bf16.msra.mxu0 0
    %155 = vmatpush.bf16.msra.mxu0 0
    %156 = vmatpush.bf16.msra.mxu0 0
    %157 = vmatpush.bf16.msra.mxu0 %v152
    %158 = vmatpush.bf16.msra.mxu0 %v138
    %159 = vmatpush.bf16.msra.mxu0 %v137
    %160 = vmatpush.bf16.msra.mxu0 %v136
    %161 = vmatpush.bf16.msra.mxu0 %v135
    %162 = vmatmul.bf16.gmra.mxu0 %v146
    %v163 = vpop.f32.mrf.mxu0
    %v164 = vadd.f32 %v111, %v163
    %v165 = vpop.f32.mrf.mxu0
    %v166 = vadd.f32 %v111, %v165
    %167 = vdwg.mxu0
    %v168 = vmax.f32 %v164, 0.0
    %v169 = vmax.f32 %v166, 0.0
    %v170 = vld [vmem:[#allocation8 + $0x24] sm:$0xf]
    %v171 = vld [vmem:[#allocation8 + $0x28] sm:$0xf]
    %v172 = vld [vmem:[#allocation8 + $0x2c] sm:$0xf]
    %v173 = vld [vmem:[#allocation8 + $0x30] sm:$0xf]
    %v174 = vld [vmem:[#allocation10 + $0x8] sm:$0x1]
    %v175 = vld [vmem:[#allocation5] sm:$0x1]
    %v176 = vld [vmem:[#allocation5 + $0x1] sm:$0x1]
    %v177 = vpack.c.bf16 %v175, %v175
    %v178 = vpack.c.bf16 %v176, %v176
    %v179 = vperm.slane %v174, 0
    %v182 = vunpack.c.l.b16 %v177
    %v183 = vunpack.c.l.b16 %v178
    %v184 = vrot.slane %v183, 7
    %vm185 = vcmask 1041409
    %v186 = vsel %vm185, %v184, %v182
    %v187 = vpack.c.b16 %v186, %v186
    %v192 = vunpack.c.l.b16 %v170
    %v193 = vunpack.c.l.b16 %v171
    %v194 = vunpack.c.l.b16 %v172
    %v195 = vunpack.c.l.b16 %v173
    %v196 = vpack.c.b16 %v193, %v192
    %v197 = vpack.c.b16 %v195, %v194
    %vm200 = vcmask 261120
    %v202 = vsel %vm200, %v187, 0
    %204 = vmatpush.bf16.msra.mxu0 0
    %205 = vmatpush.bf16.msra.mxu0 0
    %206 = vmatpush.bf16.msra.mxu0 0
    %207 = vmatpush.bf16.msra.mxu0 0
    %208 = vmatpush.bf16.msra.mxu0 0
    %209 = vmatpush.bf16.msra.mxu0 0
    %210 = vmatpush.bf16.msra.mxu0 %v197
    %211 = vmatpush.bf16.msra.mxu0 %v196
    %212 = vmatmul.bf16.gmra.mxu0 %v202
    %v213 = vpop.f32.mrf.mxu0
    %v214 = vadd.f32 %v179, %v213
    %v215 = vpop.f32.mrf.mxu0
    %216 = vdwg.mxu0
    %v218 = vrot.slane %v214, 1
    %v221 = vadd.f32 %v164, %v214
    %v222 = vadd.f32 %v166, %v218
    %v223 = vxor.u32 %v221, 2147483648
    %v224 = vxor.u32 %v222, 2147483648
    %v225 = vmul.f32 %v223, 1.442695
    %v226 = vpow.pop %v225
    %v227 = vmul.f32 %v224, 1.442695
    %v228 = vpow.pop %v227
    %v229 = vadd.f32 %v226, 1.0
    %v230 = vadd.f32 %v228, 1.0
    %v231 = vrcp.pop %v229
    %v232 = vmul.f32 %v229, %v231
    %v233 = vsub.f32 1.0, %v232
    %v234 = vmul.f32 %v231, %v233
    %v235 = vadd.f32 %v231, %v234
    %vm236 = vweird.f32 %v229
    %vm237 = vweird.f32 %v231
    %vm238 = vmor %vm236, %vm237
    %v239 = vsel %vm238, %v231, %v235
    %v240 = vand.u32 2147483647, %v229
    %vm241 = vcmp.eq.f32.partialorder %v240, 8.507059e+37
    %v242 = vand.u32 %v229, 2147483648
    %v243 = vor.u32 1.1754944e-38, %v242
    %v244 = vsel %vm241, %v243, %v239
    %v245 = vmul.f32 1.0, %v244
    %v246 = vrcp.pop %v230
    %v247 = vmul.f32 %v230, %v246
    %v248 = vsub.f32 1.0, %v247
    %v249 = vmul.f32 %v246, %v248
    %v250 = vadd.f32 %v246, %v249
    %vm251 = vweird.f32 %v230
    %vm252 = vweird.f32 %v246
    %vm253 = vmor %vm251, %vm252
    %v254 = vsel %vm253, %v246, %v250
    %v255 = vand.u32 2147483647, %v230
    %vm256 = vcmp.eq.f32.partialorder %v255, 8.507059e+37
    %v257 = vand.u32 %v230, 2147483648
    %v258 = vor.u32 1.1754944e-38, %v257
    %v259 = vsel %vm256, %v258, %v254
    %v260 = vmul.f32 1.0, %v259
    %261 = vrot.lane.b32.xlu0 %v214, 64
    %v262 = vpop.permute.xlu0 %261
    %263 = vrot.lane.b32.xlu0 %v218, 64
    %v264 = vpop.permute.xlu0 %263
    %v267 = vmul.f32 %v245, %v262
    %v268 = vmul.f32 %v260, %v264
    %271 = vrot.lane.b32.xlu0 %v267, 64
    %v272 = vpop.permute.xlu0 %271
    %273 = vrot.lane.b32.xlu0 %v268, 64
    %v274 = vpop.permute.xlu0 %273
    %v277 = vadd.f32 %v164, %v272
    %v278 = vadd.f32 %v166, %v274
    %v279 = vtanh.pop %v277
    %v280 = vtanh.pop %v278
    %v281 = vsub.f32 1.0, %v245
    %v282 = vsub.f32 1.0, %v260
    %285 = vrot.lane.b32.xlu0 %v279, 96
    %v286 = vpop.permute.xlu0 %285
    %287 = vrot.lane.b32.xlu0 %v280, 96
    %v288 = vpop.permute.xlu0 %287
    %v291 = vmul.f32 %v281, %v286
    %v292 = vmul.f32 %v282, %v288
    %v295 = vperm.slane %v175, 0
    %v296 = vperm.slane %v176, 0
    %297 = vrot.lane.b32.xlu0 %v295, 32
    %v298 = vpop.permute.xlu0 %297
    %299 = vrot.lane.b32.xlu0 %v296, 32
    %v300 = vpop.permute.xlu0 %299
    %v303 = vmul.f32 %v245, %v298
    %v304 = vmul.f32 %v260, %v300
    %v305 = vadd.f32 %v291, %v303
    %v306 = vadd.f32 %v292, %v304
    %309 = vrot.lane.b32.xlu0 %v305, 96
    %v310 = vpop.permute.xlu0 %309
    %311 = vrot.lane.b32.xlu0 %v306, 96
    %v312 = vpop.permute.xlu0 %311
    %vm315 = vcmask 253952
    %316 = vst.msk [vmem:[#allocation2] sm:$0x1] %vm315, %v310
    %317 = vst.msk [vmem:[#allocation2 + $0x8] sm:$0x1] %vm315, %v312
    %v318 = vpack.c.bf16 %v305, %v305
    %v319 = vpack.c.bf16 %v306, %v306
    %v322 = vunpack.c.l.b16 %v318
    %v323 = vunpack.c.l.b16 %v319
    %v324 = vrot.slane %v323, 7
    %v325 = vsel %vm185, %v324, %v322
    %v326 = vpack.c.b16 %v325, %v325
    %327 = vrot.lane.b32.xlu0 %v326, 96
    %v328 = vpop.permute.xlu0 %327
    %v330 = vsel %vm200, %v328, 0
    %332 = vmatpush.bf16.msra.mxu0 0
    %333 = vmatpush.bf16.msra.mxu0 0
    %334 = vmatpush.bf16.msra.mxu0 0
    %335 = vmatpush.bf16.msra.mxu0 0
    %336 = vmatpush.bf16.msra.mxu0 0
    %337 = vmatpush.bf16.msra.mxu0 0
    %338 = vmatpush.bf16.msra.mxu0 %v197
    %339 = vmatpush.bf16.msra.mxu0 %v196
    %340 = vmatmul.bf16.gmra.mxu0 %v330
    %v341 = vpop.f32.mrf.mxu0
    %v342 = vadd.f32 %v179, %v341
    %v343 = vpop.f32.mrf.mxu0
    %344 = vdwg.mxu0
    %v346 = vrot.slane %v342, 7
    %v349 = vadd.f32 %v164, %v346
    %v350 = vadd.f32 %v166, %v342
    %v351 = vxor.u32 %v349, 2147483648
    %v352 = vxor.u32 %v350, 2147483648
    %v353 = vmul.f32 %v351, 1.442695
    %v354 = vpow.pop %v353
    %v355 = vmul.f32 %v352, 1.442695
    %v356 = vpow.pop %v355
    %v357 = vadd.f32 %v354, 1.0
    %v358 = vadd.f32 %v356, 1.0
    %v359 = vrcp.pop %v357
    %v360 = vmul.f32 %v357, %v359
    %v361 = vsub.f32 1.0, %v360
    %v362 = vmul.f32 %v359, %v361
    %v363 = vadd.f32 %v359, %v362
    %vm364 = vweird.f32 %v357
    %vm365 = vweird.f32 %v359
    %vm366 = vmor %vm364, %vm365
    %v367 = vsel %vm366, %v359, %v363
    %v368 = vand.u32 2147483647, %v357
    %vm369 = vcmp.eq.f32.partialorder %v368, 8.507059e+37
    %v370 = vand.u32 %v357, 2147483648
    %v371 = vor.u32 1.1754944e-38, %v370
    %v372 = vsel %vm369, %v371, %v367
    %v373 = vmul.f32 1.0, %v372
    %v374 = vrcp.pop %v358
    %v375 = vmul.f32 %v358, %v374
    %v376 = vsub.f32 1.0, %v375
    %v377 = vmul.f32 %v374, %v376
    %v378 = vadd.f32 %v374, %v377
    %vm379 = vweird.f32 %v358
    %vm380 = vweird.f32 %v374
    %vm381 = vmor %vm379, %vm380
    %v382 = vsel %vm381, %v374, %v378
    %v383 = vand.u32 2147483647, %v358
    %vm384 = vcmp.eq.f32.partialorder %v383, 8.507059e+37
    %v385 = vand.u32 %v358, 2147483648
    %v386 = vor.u32 1.1754944e-38, %v385
    %v387 = vsel %vm384, %v386, %v382
    %v388 = vmul.f32 1.0, %v387
    %389 = vrot.lane.b32.xlu0 %v346, 64
    %v390 = vpop.permute.xlu0 %389
    %391 = vrot.lane.b32.xlu0 %v342, 64
    %v392 = vpop.permute.xlu0 %391
    %v395 = vmul.f32 %v373, %v390
    %v396 = vmul.f32 %v388, %v392
    %399 = vrot.lane.b32.xlu0 %v395, 64
    %v400 = vpop.permute.xlu0 %399
    %401 = vrot.lane.b32.xlu0 %v396, 64
    %v402 = vpop.permute.xlu0 %401
    %v405 = vadd.f32 %v164, %v400
    %v406 = vadd.f32 %v166, %v402
    %v407 = vtanh.pop %v405
    %v408 = vtanh.pop %v406
    %v409 = vsub.f32 1.0, %v373
    %v410 = vsub.f32 1.0, %v388
    %413 = vrot.lane.b32.xlu0 %v407, 96
    %v414 = vpop.permute.xlu0 %413
    %415 = vrot.lane.b32.xlu0 %v408, 96
    %v416 = vpop.permute.xlu0 %415
    %v419 = vmul.f32 %v409, %v414
    %v420 = vmul.f32 %v410, %v416
    %v421 = vrot.slane %v305, 7
    %v422 = vrot.slane %v306, 7
    %v425 = vmul.f32 %v373, %v421
    %v426 = vmul.f32 %v388, %v422
    %v427 = vadd.f32 %v419, %v425
    %v428 = vadd.f32 %v420, %v426
    %431 = vrot.lane.b32.xlu0 %v427, 96
    %v432 = vpop.permute.xlu0 %431
    %433 = vrot.lane.b32.xlu0 %v428, 96
    %v434 = vpop.permute.xlu0 %433
    %vm437 = vcmask 254977
    %438 = vst.msk [vmem:[#allocation2] sm:$0x2] %vm437, %v432
    %439 = vst.msk [vmem:[#allocation2 + $0x8] sm:$0x2] %vm437, %v434
    %v440 = vpack.c.bf16 %v427, %v427
    %v441 = vpack.c.bf16 %v428, %v428
    %v444 = vunpack.c.l.b16 %v440
    %v445 = vunpack.c.l.b16 %v441
    %v446 = vrot.slane %v444, 1
    %v447 = vsel %vm185, %v445, %v446
    %v448 = vpack.c.b16 %v447, %v447
    %449 = vrot.lane.b32.xlu0 %v448, 96
    %v450 = vpop.permute.xlu0 %449
    %v452 = vsel %vm200, %v450, 0
    %454 = vmatpush.bf16.msra.mxu0 0
    %455 = vmatpush.bf16.msra.mxu0 0
    %456 = vmatpush.bf16.msra.mxu0 0
    %457 = vmatpush.bf16.msra.mxu0 0
    %458 = vmatpush.bf16.msra.mxu0 0
    %459 = vmatpush.bf16.msra.mxu0 0
    %460 = vmatpush.bf16.msra.mxu0 %v197
    %461 = vmatpush.bf16.msra.mxu0 %v196
    %462 = vmatmul.bf16.gmra.mxu0 %v452
    %v463 = vpop.f32.mrf.mxu0
    %v464 = vadd.f32 %v179, %v463
    %v465 = vpop.f32.mrf.mxu0
    %466 = vdwg.mxu0
    %v468 = vrot.slane %v464, 6
    %v469 = vrot.slane %v464, 7
    %v472 = vadd.f32 %v164, %v468
    %v473 = vadd.f32 %v166, %v469
    %v474 = vxor.u32 %v472, 2147483648
    %v475 = vxor.u32 %v473, 2147483648
    %v476 = vmul.f32 %v474, 1.442695
    %v477 = vpow.pop %v476
    %v478 = vmul.f32 %v475, 1.442695
    %v479 = vpow.pop %v478
    %v480 = vadd.f32 %v477, 1.0
    %v481 = vadd.f32 %v479, 1.0
    %v482 = vrcp.pop %v480
    %v483 = vmul.f32 %v480, %v482
    %v484 = vsub.f32 1.0, %v483
    %v485 = vmul.f32 %v482, %v484
    %v486 = vadd.f32 %v482, %v485
    %vm487 = vweird.f32 %v480
    %vm488 = vweird.f32 %v482
    %vm489 = vmor %vm487, %vm488
    %v490 = vsel %vm489, %v482, %v486
    %v491 = vand.u32 2147483647, %v480
    %vm492 = vcmp.eq.f32.partialorder %v491, 8.507059e+37
    %v493 = vand.u32 %v480, 2147483648
    %v494 = vor.u32 1.1754944e-38, %v493
    %v495 = vsel %vm492, %v494, %v490
    %v496 = vmul.f32 1.0, %v495
    %v497 = vrcp.pop %v481
    %v498 = vmul.f32 %v481, %v497
    %v499 = vsub.f32 1.0, %v498
    %v500 = vmul.f32 %v497, %v499
    %v501 = vadd.f32 %v497, %v500
    %vm502 = vweird.f32 %v481
    %vm503 = vweird.f32 %v497
    %vm504 = vmor %vm502, %vm503
    %v505 = vsel %vm504, %v497, %v501
    %v506 = vand.u32 2147483647, %v481
    %vm507 = vcmp.eq.f32.partialorder %v506, 8.507059e+37
    %v508 = vand.u32 %v481, 2147483648
    %v509 = vor.u32 1.1754944e-38, %v508
    %v510 = vsel %vm507, %v509, %v505
    %v511 = vmul.f32 1.0, %v510
    %512 = vrot.lane.b32.xlu0 %v468, 64
    %v513 = vpop.permute.xlu0 %512
    %514 = vrot.lane.b32.xlu0 %v469, 64
    %v515 = vpop.permute.xlu0 %514
    %v518 = vmul.f32 %v496, %v513
    %v519 = vmul.f32 %v511, %v515
    %522 = vrot.lane.b32.xlu0 %v518, 64
    %v523 = vpop.permute.xlu0 %522
    %524 = vrot.lane.b32.xlu0 %v519, 64
    %v525 = vpop.permute.xlu0 %524
    %v528 = vadd.f32 %v164, %v523
    %v529 = vadd.f32 %v166, %v525
    %v530 = vtanh.pop %v528
    %v531 = vtanh.pop %v529
    %v532 = vsub.f32 1.0, %v496
    %v533 = vsub.f32 1.0, %v511
    %536 = vrot.lane.b32.xlu0 %v530, 96
    %v537 = vpop.permute.xlu0 %536
    %538 = vrot.lane.b32.xlu0 %v531, 96
    %v539 = vpop.permute.xlu0 %538
    %v542 = vmul.f32 %v532, %v537
    %v543 = vmul.f32 %v533, %v539
    %v544 = vrot.slane %v427, 7
    %v545 = vrot.slane %v428, 7
    %v548 = vmul.f32 %v496, %v544
    %v549 = vmul.f32 %v511, %v545
    %v550 = vadd.f32 %v542, %v548
    %v551 = vadd.f32 %v543, %v549
    %554 = vrot.lane.b32.xlu0 %v550, 96
    %v555 = vpop.permute.xlu0 %554
    %556 = vrot.lane.b32.xlu0 %v551, 96
    %v557 = vpop.permute.xlu0 %556
    %vm560 = vcmask 256002
    %561 = vst.msk [vmem:[#allocation2] sm:$0x4] %vm560, %v555
    %562 = vst.msk [vmem:[#allocation2 + $0x8] sm:$0x4] %vm560, %v557
    %v563 = vpack.c.bf16 %v550, %v550
    %v564 = vpack.c.bf16 %v551, %v551
    %v567 = vunpack.c.l.b16 %v563
    %v568 = vunpack.c.l.b16 %v564
    %v569 = vrot.slane %v567, 2
    %v570 = vrot.slane %v568, 1
    %v571 = vsel %vm185, %v570, %v569
    %v572 = vpack.c.b16 %v571, %v571
    %573 = vrot.lane.b32.xlu0 %v572, 96
    %v574 = vpop.permute.xlu0 %573
    %v576 = vsel %vm200, %v574, 0
    %578 = vmatpush.bf16.msra.mxu0 0
    %579 = vmatpush.bf16.msra.mxu0 0
    %580 = vmatpush.bf16.msra.mxu0 0
    %581 = vmatpush.bf16.msra.mxu0 0
    %582 = vmatpush.bf16.msra.mxu0 0
    %583 = vmatpush.bf16.msra.mxu0 0
    %584 = vmatpush.bf16.msra.mxu0 %v197
    %585 = vmatpush.bf16.msra.mxu0 %v196
    %586 = vmatmul.bf16.gmra.mxu0 %v576
    %v587 = vpop.f32.mrf.mxu0
    %v588 = vadd.f32 %v179, %v587
    %v589 = vpop.f32.mrf.mxu0
    %590 = vdwg.mxu0
    %v592 = vrot.slane %v588, 5
    %v593 = vrot.slane %v588, 6
    %v596 = vadd.f32 %v164, %v592
    %v597 = vadd.f32 %v166, %v593
    %v598 = vxor.u32 %v596, 2147483648
    %v599 = vxor.u32 %v597, 2147483648
    %v600 = vmul.f32 %v598, 1.442695
    %v601 = vpow.pop %v600
    %v602 = vmul.f32 %v599, 1.442695
    %v603 = vpow.pop %v602
    %v604 = vadd.f32 %v601, 1.0
    %v605 = vadd.f32 %v603, 1.0
    %v606 = vrcp.pop %v604
    %v607 = vmul.f32 %v604, %v606
    %v608 = vsub.f32 1.0, %v607
    %v609 = vmul.f32 %v606, %v608
    %v610 = vadd.f32 %v606, %v609
    %vm611 = vweird.f32 %v604
    %vm612 = vweird.f32 %v606
    %vm613 = vmor %vm611, %vm612
    %v614 = vsel %vm613, %v606, %v610
    %v615 = vand.u32 2147483647, %v604
    %vm616 = vcmp.eq.f32.partialorder %v615, 8.507059e+37
    %v617 = vand.u32 %v604, 2147483648
    %v618 = vor.u32 1.1754944e-38, %v617
    %v619 = vsel %vm616, %v618, %v614
    %v620 = vmul.f32 1.0, %v619
    %v621 = vrcp.pop %v605
    %v622 = vmul.f32 %v605, %v621
    %v623 = vsub.f32 1.0, %v622
    %v624 = vmul.f32 %v621, %v623
    %v625 = vadd.f32 %v621, %v624
    %vm626 = vweird.f32 %v605
    %vm627 = vweird.f32 %v621
    %vm628 = vmor %vm626, %vm627
    %v629 = vsel %vm628, %v621, %v625
    %v630 = vand.u32 2147483647, %v605
    %vm631 = vcmp.eq.f32.partialorder %v630, 8.507059e+37
    %v632 = vand.u32 %v605, 2147483648
    %v633 = vor.u32 1.1754944e-38, %v632
    %v634 = vsel %vm631, %v633, %v629
    %v635 = vmul.f32 1.0, %v634
    %636 = vrot.lane.b32.xlu0 %v592, 64
    %v637 = vpop.permute.xlu0 %636
    %638 = vrot.lane.b32.xlu0 %v593, 64
    %v639 = vpop.permute.xlu0 %638
    %v642 = vmul.f32 %v620, %v637
    %v643 = vmul.f32 %v635, %v639
    %646 = vrot.lane.b32.xlu0 %v642, 64
    %v647 = vpop.permute.xlu0 %646
    %648 = vrot.lane.b32.xlu0 %v643, 64
    %v649 = vpop.permute.xlu0 %648
    %v652 = vadd.f32 %v164, %v647
    %v653 = vadd.f32 %v166, %v649
    %v654 = vtanh.pop %v652
    %v655 = vtanh.pop %v653
    %v656 = vsub.f32 1.0, %v620
    %v657 = vsub.f32 1.0, %v635
    %660 = vrot.lane.b32.xlu0 %v654, 96
    %v661 = vpop.permute.xlu0 %660
    %662 = vrot.lane.b32.xlu0 %v655, 96
    %v663 = vpop.permute.xlu0 %662
    %v666 = vmul.f32 %v656, %v661
    %v667 = vmul.f32 %v657, %v663
    %v668 = vrot.slane %v550, 7
    %v669 = vrot.slane %v551, 7
    %v672 = vmul.f32 %v620, %v668
    %v673 = vmul.f32 %v635, %v669
    %v674 = vadd.f32 %v666, %v672
    %v675 = vadd.f32 %v667, %v673
    %678 = vrot.lane.b32.xlu0 %v674, 96
    %v679 = vpop.permute.xlu0 %678
    %680 = vrot.lane.b32.xlu0 %v675, 96
    %v681 = vpop.permute.xlu0 %680
    %vm684 = vcmask 257027
    %685 = vst.msk [vmem:[#allocation2] sm:$0x8] %vm684, %v679
    %686 = vst.msk [vmem:[#allocation2 + $0x8] sm:$0x8] %vm684, %v681
    %v687 = vpack.c.bf16 %v674, %v674
    %v688 = vpack.c.bf16 %v675, %v675
    %v691 = vunpack.c.l.b16 %v687
    %v692 = vunpack.c.l.b16 %v688
    %v693 = vrot.slane %v691, 3
    %v694 = vrot.slane %v692, 2
    %v695 = vsel %vm185, %v694, %v693
    %v696 = vpack.c.b16 %v695, %v695
    %697 = vrot.lane.b32.xlu0 %v696, 96
    %v698 = vpop.permute.xlu0 %697
    %v700 = vsel %vm200, %v698, 0
    %702 = vmatpush.bf16.msra.mxu0 0
    %703 = vmatpush.bf16.msra.mxu0 0
    %704 = vmatpush.bf16.msra.mxu0 0
    %705 = vmatpush.bf16.msra.mxu0 0
    %706 = vmatpush.bf16.msra.mxu0 0
    %707 = vmatpush.bf16.msra.mxu0 0
    %708 = vmatpush.bf16.msra.mxu0 %v197
    %709 = vmatpush.bf16.msra.mxu0 %v196
    %710 = vmatmul.bf16.gmra.mxu0 %v700
    %v711 = vpop.f32.mrf.mxu0
    %v712 = vadd.f32 %v179, %v711
    %v713 = vpop.f32.mrf.mxu0
    %714 = vdwg.mxu0
    %v716 = vrot.slane %v712, 4
    %v717 = vrot.slane %v712, 5
    %v720 = vadd.f32 %v164, %v716
    %v721 = vadd.f32 %v166, %v717
    %v722 = vxor.u32 %v720, 2147483648
    %v723 = vxor.u32 %v721, 2147483648
    %v724 = vmul.f32 %v722, 1.442695
    %v725 = vpow.pop %v724
    %v726 = vmul.f32 %v723, 1.442695
    %v727 = vpow.pop %v726
    %v728 = vadd.f32 %v725, 1.0
    %v729 = vadd.f32 %v727, 1.0
    %v730 = vrcp.pop %v728
    %v731 = vmul.f32 %v728, %v730
    %v732 = vsub.f32 1.0, %v731
    %v733 = vmul.f32 %v730, %v732
    %v734 = vadd.f32 %v730, %v733
    %vm735 = vweird.f32 %v728
    %vm736 = vweird.f32 %v730
    %vm737 = vmor %vm735, %vm736
    %v738 = vsel %vm737, %v730, %v734
    %v739 = vand.u32 2147483647, %v728
    %vm740 = vcmp.eq.f32.partialorder %v739, 8.507059e+37
    %v741 = vand.u32 %v728, 2147483648
    %v742 = vor.u32 1.1754944e-38, %v741
    %v743 = vsel %vm740, %v742, %v738
    %v744 = vmul.f32 1.0, %v743
    %v745 = vrcp.pop %v729
    %v746 = vmul.f32 %v729, %v745
    %v747 = vsub.f32 1.0, %v746
    %v748 = vmul.f32 %v745, %v747
    %v749 = vadd.f32 %v745, %v748
    %vm750 = vweird.f32 %v729
    %vm751 = vweird.f32 %v745
    %vm752 = vmor %vm750, %vm751
    %v753 = vsel %vm752, %v745, %v749
    %v754 = vand.u32 2147483647, %v729
    %vm755 = vcmp.eq.f32.partialorder %v754, 8.507059e+37
    %v756 = vand.u32 %v729, 2147483648
    %v757 = vor.u32 1.1754944e-38, %v756
    %v758 = vsel %vm755, %v757, %v753
    %v759 = vmul.f32 1.0, %v758
    %760 = vrot.lane.b32.xlu0 %v716, 64
    %v761 = vpop.permute.xlu0 %760
    %762 = vrot.lane.b32.xlu0 %v717, 64
    %v763 = vpop.permute.xlu0 %762
    %v766 = vmul.f32 %v744, %v761
    %v767 = vmul.f32 %v759, %v763
    %770 = vrot.lane.b32.xlu0 %v766, 64
    %v771 = vpop.permute.xlu0 %770
    %772 = vrot.lane.b32.xlu0 %v767, 64
    %v773 = vpop.permute.xlu0 %772
    %v776 = vadd.f32 %v164, %v771
    %v777 = vadd.f32 %v166, %v773
    %v778 = vtanh.pop %v776
    %v779 = vtanh.pop %v777
    %v780 = vsub.f32 1.0, %v744
    %v781 = vsub.f32 1.0, %v759
    %784 = vrot.lane.b32.xlu0 %v778, 96
    %v785 = vpop.permute.xlu0 %784
    %786 = vrot.lane.b32.xlu0 %v779, 96
    %v787 = vpop.permute.xlu0 %786
    %v790 = vmul.f32 %v780, %v785
    %v791 = vmul.f32 %v781, %v787
    %v792 = vrot.slane %v674, 7
    %v793 = vrot.slane %v675, 7
    %v796 = vmul.f32 %v744, %v792
    %v797 = vmul.f32 %v759, %v793
    %v798 = vadd.f32 %v790, %v796
    %v799 = vadd.f32 %v791, %v797
    %802 = vrot.lane.b32.xlu0 %v798, 96
    %v803 = vpop.permute.xlu0 %802
    %804 = vrot.lane.b32.xlu0 %v799, 96
    %v805 = vpop.permute.xlu0 %804
    %vm808 = vcmask 258052
    %809 = vst.msk [vmem:[#allocation2] sm:$0x10] %vm808, %v803
    %810 = vst.msk [vmem:[#allocation2 + $0x8] sm:$0x10] %vm808, %v805
    %v811 = vpack.c.bf16 %v798, %v798
    %v812 = vpack.c.bf16 %v799, %v799
    %v815 = vunpack.c.l.b16 %v811
    %v816 = vunpack.c.l.b16 %v812
    %v817 = vrot.slane %v815, 4
    %v818 = vrot.slane %v816, 3
    %v819 = vsel %vm185, %v818, %v817
    %v820 = vpack.c.b16 %v819, %v819
    %821 = vrot.lane.b32.xlu0 %v820, 96
    %v822 = vpop.permute.xlu0 %821
    %v824 = vsel %vm200, %v822, 0
    %826 = vmatpush.bf16.msra.mxu0 0
    %827 = vmatpush.bf16.msra.mxu0 0
    %828 = vmatpush.bf16.msra.mxu0 0
    %829 = vmatpush.bf16.msra.mxu0 0
    %830 = vmatpush.bf16.msra.mxu0 0
    %831 = vmatpush.bf16.msra.mxu0 0
    %832 = vmatpush.bf16.msra.mxu0 %v197
    %833 = vmatpush.bf16.msra.mxu0 %v196
    %834 = vmatmul.bf16.gmra.mxu0 %v824
    %v835 = vpop.f32.mrf.mxu0
    %v836 = vadd.f32 %v179, %v835
    %v837 = vpop.f32.mrf.mxu0
    %838 = vdwg.mxu0
    %v840 = vrot.slane %v836, 3
    %v841 = vrot.slane %v836, 4
    %v844 = vadd.f32 %v164, %v840
    %v845 = vadd.f32 %v166, %v841
    %v846 = vxor.u32 %v844, 2147483648
    %v847 = vxor.u32 %v845, 2147483648
    %v848 = vmul.f32 %v846, 1.442695
    %v849 = vpow.pop %v848
    %v850 = vmul.f32 %v847, 1.442695
    %v851 = vpow.pop %v850
    %v852 = vadd.f32 %v849, 1.0
    %v853 = vadd.f32 %v851, 1.0
    %v854 = vrcp.pop %v852
    %v855 = vmul.f32 %v852, %v854
    %v856 = vsub.f32 1.0, %v855
    %v857 = vmul.f32 %v854, %v856
    %v858 = vadd.f32 %v854, %v857
    %vm859 = vweird.f32 %v852
    %vm860 = vweird.f32 %v854
    %vm861 = vmor %vm859, %vm860
    %v862 = vsel %vm861, %v854, %v858
    %v863 = vand.u32 2147483647, %v852
    %vm864 = vcmp.eq.f32.partialorder %v863, 8.507059e+37
    %v865 = vand.u32 %v852, 2147483648
    %v866 = vor.u32 1.1754944e-38, %v865
    %v867 = vsel %vm864, %v866, %v862
    %v868 = vmul.f32 1.0, %v867
    %v869 = vrcp.pop %v853
    %v870 = vmul.f32 %v853, %v869
    %v871 = vsub.f32 1.0, %v870
    %v872 = vmul.f32 %v869, %v871
    %v873 = vadd.f32 %v869, %v872
    %vm874 = vweird.f32 %v853
    %vm875 = vweird.f32 %v869
    %vm876 = vmor %vm874, %vm875
    %v877 = vsel %vm876, %v869, %v873
    %v878 = vand.u32 2147483647, %v853
    %vm879 = vcmp.eq.f32.partialorder %v878, 8.507059e+37
    %v880 = vand.u32 %v853, 2147483648
    %v881 = vor.u32 1.1754944e-38, %v880
    %v882 = vsel %vm879, %v881, %v877
    %v883 = vmul.f32 1.0, %v882
    %884 = vrot.lane.b32.xlu0 %v840, 64
    %v885 = vpop.permute.xlu0 %884
    %886 = vrot.lane.b32.xlu0 %v841, 64
    %v887 = vpop.permute.xlu0 %886
    %v890 = vmul.f32 %v868, %v885
    %v891 = vmul.f32 %v883, %v887
    %894 = vrot.lane.b32.xlu0 %v890, 64
    %v895 = vpop.permute.xlu0 %894
    %896 = vrot.lane.b32.xlu0 %v891, 64
    %v897 = vpop.permute.xlu0 %896
    %v900 = vadd.f32 %v164, %v895
    %v901 = vadd.f32 %v166, %v897
    %v902 = vtanh.pop %v900
    %v903 = vtanh.pop %v901
    %v904 = vsub.f32 1.0, %v868
    %v905 = vsub.f32 1.0, %v883
    %908 = vrot.lane.b32.xlu0 %v902, 96
    %v909 = vpop.permute.xlu0 %908
    %910 = vrot.lane.b32.xlu0 %v903, 96
    %v911 = vpop.permute.xlu0 %910
    %v914 = vmul.f32 %v904, %v909
    %v915 = vmul.f32 %v905, %v911
    %v916 = vrot.slane %v798, 7
    %v917 = vrot.slane %v799, 7
    %v920 = vmul.f32 %v868, %v916
    %v921 = vmul.f32 %v883, %v917
    %v922 = vadd.f32 %v914, %v920
    %v923 = vadd.f32 %v915, %v921
    %926 = vrot.lane.b32.xlu0 %v922, 96
    %v927 = vpop.permute.xlu0 %926
    %928 = vrot.lane.b32.xlu0 %v923, 96
    %v929 = vpop.permute.xlu0 %928
    %vm932 = vcmask 259077
    %933 = vst.msk [vmem:[#allocation2] sm:$0x20] %vm932, %v927
    %934 = vst.msk [vmem:[#allocation2 + $0x8] sm:$0x20] %vm932, %v929
    %v935 = vpack.c.bf16 %v922, %v922
    %v936 = vpack.c.bf16 %v923, %v923
    %v939 = vunpack.c.l.b16 %v935
    %v940 = vunpack.c.l.b16 %v936
    %v941 = vrot.slane %v939, 5
    %v942 = vrot.slane %v940, 4
    %v943 = vsel %vm185, %v942, %v941
    %v944 = vpack.c.b16 %v943, %v943
    %945 = vrot.lane.b32.xlu0 %v944, 96
    %v946 = vpop.permute.xlu0 %945
    %v948 = vsel %vm200, %v946, 0
    %950 = vmatpush.bf16.msra.mxu0 0
    %951 = vmatpush.bf16.msra.mxu0 0
    %952 = vmatpush.bf16.msra.mxu0 0
    %953 = vmatpush.bf16.msra.mxu0 0
    %954 = vmatpush.bf16.msra.mxu0 0
    %955 = vmatpush.bf16.msra.mxu0 0
    %956 = vmatpush.bf16.msra.mxu0 %v197
    %957 = vmatpush.bf16.msra.mxu0 %v196
    %958 = vmatmul.bf16.gmra.mxu0 %v948
    %v959 = vpop.f32.mrf.mxu0
    %v960 = vadd.f32 %v179, %v959
    %v961 = vpop.f32.mrf.mxu0
    %962 = vdwg.mxu0
    %v964 = vrot.slane %v960, 2
    %v965 = vrot.slane %v960, 3
    %v968 = vadd.f32 %v164, %v964
    %v969 = vadd.f32 %v166, %v965
    %v970 = vxor.u32 %v968, 2147483648
    %v971 = vxor.u32 %v969, 2147483648
    %v972 = vmul.f32 %v970, 1.442695
    %v973 = vpow.pop %v972
    %v974 = vmul.f32 %v971, 1.442695
    %v975 = vpow.pop %v974
    %v976 = vadd.f32 %v973, 1.0
    %v977 = vadd.f32 %v975, 1.0
    %v978 = vrcp.pop %v976
    %v979 = vmul.f32 %v976, %v978
    %v980 = vsub.f32 1.0, %v979
    %v981 = vmul.f32 %v978, %v980
    %v982 = vadd.f32 %v978, %v981
    %vm983 = vweird.f32 %v976
    %vm984 = vweird.f32 %v978
    %vm985 = vmor %vm983, %vm984
    %v986 = vsel %vm985, %v978, %v982
    %v987 = vand.u32 2147483647, %v976
    %vm988 = vcmp.eq.f32.partialorder %v987, 8.507059e+37
    %v989 = vand.u32 %v976, 2147483648
    %v990 = vor.u32 1.1754944e-38, %v989
    %v991 = vsel %vm988, %v990, %v986
    %v992 = vmul.f32 1.0, %v991
    %v993 = vrcp.pop %v977
    %v994 = vmul.f32 %v977, %v993
    %v995 = vsub.f32 1.0, %v994
    %v996 = vmul.f32 %v993, %v995
    %v997 = vadd.f32 %v993, %v996
    %vm998 = vweird.f32 %v977
    %vm999 = vweird.f32 %v993
    %vm1000 = vmor %vm998, %vm999
    %v1001 = vsel %vm1000, %v993, %v997
    %v1002 = vand.u32 2147483647, %v977
    %vm1003 = vcmp.eq.f32.partialorder %v1002, 8.507059e+37
    %v1004 = vand.u32 %v977, 2147483648
    %v1005 = vor.u32 1.1754944e-38, %v1004
    %v1006 = vsel %vm1003, %v1005, %v1001
    %v1007 = vmul.f32 1.0, %v1006
    %1008 = vrot.lane.b32.xlu0 %v964, 64
    %v1009 = vpop.permute.xlu0 %1008
    %1010 = vrot.lane.b32.xlu0 %v965, 64
    %v1011 = vpop.permute.xlu0 %1010
    %v1014 = vmul.f32 %v992, %v1009
    %v1015 = vmul.f32 %v1007, %v1011
    %1018 = vrot.lane.b32.xlu0 %v1014, 64
    %v1019 = vpop.permute.xlu0 %1018
    %1020 = vrot.lane.b32.xlu0 %v1015, 64
    %v1021 = vpop.permute.xlu0 %1020
    %v1024 = vadd.f32 %v164, %v1019
    %v1025 = vadd.f32 %v166, %v1021
    %v1026 = vtanh.pop %v1024
    %v1027 = vtanh.pop %v1025
    %v1028 = vsub.f32 1.0, %v992
    %v1029 = vsub.f32 1.0, %v1007
    %1032 = vrot.lane.b32.xlu0 %v1026, 96
    %v1033 = vpop.permute.xlu0 %1032
    %1034 = vrot.lane.b32.xlu0 %v1027, 96
    %v1035 = vpop.permute.xlu0 %1034
    %v1038 = vmul.f32 %v1028, %v1033
    %v1039 = vmul.f32 %v1029, %v1035
    %v1040 = vrot.slane %v922, 7
    %v1041 = vrot.slane %v923, 7
    %v1044 = vmul.f32 %v992, %v1040
    %v1045 = vmul.f32 %v1007, %v1041
    %v1046 = vadd.f32 %v1038, %v1044
    %v1047 = vadd.f32 %v1039, %v1045
    %1050 = vrot.lane.b32.xlu0 %v1046, 96
    %v1051 = vpop.permute.xlu0 %1050
    %1052 = vrot.lane.b32.xlu0 %v1047, 96
    %v1053 = vpop.permute.xlu0 %1052
    %vm1056 = vcmask 260102
    %1057 = vst.msk [vmem:[#allocation2] sm:$0x40] %vm1056, %v1051
    %1058 = vst.msk [vmem:[#allocation2 + $0x8] sm:$0x40] %vm1056, %v1053
    %v1059 = vpack.c.bf16 %v1046, %v1046
    %v1060 = vpack.c.bf16 %v1047, %v1047
    %v1063 = vunpack.c.l.b16 %v1059
    %v1064 = vunpack.c.l.b16 %v1060
    %v1065 = vrot.slane %v1063, 6
    %v1066 = vrot.slane %v1064, 5
    %v1067 = vsel %vm185, %v1066, %v1065
    %v1068 = vpack.c.b16 %v1067, %v1067
    %1069 = vrot.lane.b32.xlu0 %v1068, 96
    %v1070 = vpop.permute.xlu0 %1069
    %v1072 = vsel %vm200, %v1070, 0
    %1074 = vmatpush.bf16.msra.mxu0 0
    %1075 = vmatpush.bf16.msra.mxu0 0
    %1076 = vmatpush.bf16.msra.mxu0 0
    %1077 = vmatpush.bf16.msra.mxu0 0
    %1078 = vmatpush.bf16.msra.mxu0 0
    %1079 = vmatpush.bf16.msra.mxu0 0
    %1080 = vmatpush.bf16.msra.mxu0 %v197
    %1081 = vmatpush.bf16.msra.mxu0 %v196
    %1082 = vmatmul.bf16.gmra.mxu0 %v1072
    %v1083 = vpop.f32.mrf.mxu0
    %v1084 = vadd.f32 %v179, %v1083
    %v1085 = vpop.f32.mrf.mxu0
    %1086 = vdwg.mxu0
    %v1088 = vrot.slane %v1084, 1
    %v1089 = vrot.slane %v1084, 2
    %v1092 = vadd.f32 %v164, %v1088
    %v1093 = vadd.f32 %v166, %v1089
    %v1094 = vxor.u32 %v1092, 2147483648
    %v1095 = vxor.u32 %v1093, 2147483648
    %v1096 = vmul.f32 %v1094, 1.442695
    %v1097 = vpow.pop %v1096
    %v1098 = vmul.f32 %v1095, 1.442695
    %v1099 = vpow.pop %v1098
    %v1100 = vadd.f32 %v1097, 1.0
    %v1101 = vadd.f32 %v1099, 1.0
    %v1102 = vrcp.pop %v1100
    %v1103 = vmul.f32 %v1100, %v1102
    %v1104 = vsub.f32 1.0, %v1103
    %v1105 = vmul.f32 %v1102, %v1104
    %v1106 = vadd.f32 %v1102, %v1105
    %vm1107 = vweird.f32 %v1100
    %vm1108 = vweird.f32 %v1102
    %vm1109 = vmor %vm1107, %vm1108
    %v1110 = vsel %vm1109, %v1102, %v1106
    %v1111 = vand.u32 2147483647, %v1100
    %vm1112 = vcmp.eq.f32.partialorder %v1111, 8.507059e+37
    %v1113 = vand.u32 %v1100, 2147483648
    %v1114 = vor.u32 1.1754944e-38, %v1113
    %v1115 = vsel %vm1112, %v1114, %v1110
    %v1116 = vmul.f32 1.0, %v1115
    %v1117 = vrcp.pop %v1101
    %v1118 = vmul.f32 %v1101, %v1117
    %v1119 = vsub.f32 1.0, %v1118
    %v1120 = vmul.f32 %v1117, %v1119
    %v1121 = vadd.f32 %v1117, %v1120
    %vm1122 = vweird.f32 %v1101
    %vm1123 = vweird.f32 %v1117
    %vm1124 = vmor %vm1122, %vm1123
    %v1125 = vsel %vm1124, %v1117, %v1121
    %v1126 = vand.u32 2147483647, %v1101
    %vm1127 = vcmp.eq.f32.partialorder %v1126, 8.507059e+37
    %v1128 = vand.u32 %v1101, 2147483648
    %v1129 = vor.u32 1.1754944e-38, %v1128
    %v1130 = vsel %vm1127, %v1129, %v1125
    %v1131 = vmul.f32 1.0, %v1130
    %1132 = vrot.lane.b32.xlu0 %v1088, 64
    %v1133 = vpop.permute.xlu0 %1132
    %1134 = vrot.lane.b32.xlu0 %v1089, 64
    %v1135 = vpop.permute.xlu0 %1134
    %v1138 = vmul.f32 %v1116, %v1133
    %v1139 = vmul.f32 %v1131, %v1135
    %1142 = vrot.lane.b32.xlu0 %v1138, 64
    %v1143 = vpop.permute.xlu0 %1142
    %1144 = vrot.lane.b32.xlu0 %v1139, 64
    %v1145 = vpop.permute.xlu0 %1144
    %v1148 = vadd.f32 %v164, %v1143
    %v1149 = vadd.f32 %v166, %v1145
    %v1150 = vtanh.pop %v1148
    %v1151 = vtanh.pop %v1149
    %v1152 = vsub.f32 1.0, %v1116
    %v1153 = vsub.f32 1.0, %v1131
    %1156 = vrot.lane.b32.xlu0 %v1150, 96
    %v1157 = vpop.permute.xlu0 %1156
    %1158 = vrot.lane.b32.xlu0 %v1151, 96
    %v1159 = vpop.permute.xlu0 %1158
    %v1162 = vmul.f32 %v1152, %v1157
    %v1163 = vmul.f32 %v1153, %v1159
    %v1164 = vrot.slane %v1046, 7
    %v1165 = vrot.slane %v1047, 7
    %v1168 = vmul.f32 %v1116, %v1164
    %v1169 = vmul.f32 %v1131, %v1165
    %v1170 = vadd.f32 %v1162, %v1168
    %v1171 = vadd.f32 %v1163, %v1169
    %1174 = vrot.lane.b32.xlu0 %v1170, 96
    %v1175 = vpop.permute.xlu0 %1174
    %1176 = vrot.lane.b32.xlu0 %v1171, 96
    %v1177 = vpop.permute.xlu0 %1176
    %vm1180 = vcmask 261127
    %1181 = vst.msk [vmem:[#allocation2] sm:$0x80] %vm1180, %v1175
    %1182 = vst.msk [vmem:[#allocation2 + $0x8] sm:$0x80] %vm1180, %v1177
    %v1183 = vld [vmem:[#allocation2] sm:$0xff]
    %v1184 = vld [vmem:[#allocation2 + $0x8] sm:$0xff]
    %v1185 = vld [vmem:[#allocation7] sm:$0x1]
    %v1186 = vld [vmem:[#allocation7 + $0x1] sm:$0x1]
    %v1187 = vpack.c.bf16 %v1185, %v1185
    %v1188 = vpack.c.bf16 %v1186, %v1186
    %v1189 = vpack.c.bf16 %v1184, %v1183
    %v1190 = vld [vmem:[#allocation8 + $0x34] sm:$0xf]
    %v1191 = vld [vmem:[#allocation8 + $0x38] sm:$0xf]
    %v1192 = vld [vmem:[#allocation8 + $0x3c] sm:$0xf]
    %v1193 = vld [vmem:[#allocation8 + $0x40] sm:$0xf]
    %v1194 = vld [vmem:[#allocation10 + $0x10] sm:$0x1]
    %v1195 = vperm.slane %v1194, 0
    %v1198 = vunpack.c.l.b16 %v1187
    %v1199 = vunpack.c.l.b16 %v1188
    %v1200 = vrot.slane %v1199, 7
    %v1201 = vsel %vm185, %v1200, %v1198
    %v1202 = vpack.c.b16 %v1201, %v1201
    %v1207 = vunpack.c.l.b16 %v1190
    %v1208 = vunpack.c.l.b16 %v1191
    %v1209 = vunpack.c.l.b16 %v1192
    %v1210 = vunpack.c.l.b16 %v1193
    %v1211 = vpack.c.b16 %v1208, %v1207
    %v1212 = vpack.c.b16 %v1210, %v1209
    %v1216 = vsel %vm200, %v1202, 0
    %1218 = vmatpush.bf16.msra.mxu0 0
    %1219 = vmatpush.bf16.msra.mxu0 0
    %1220 = vmatpush.bf16.msra.mxu0 0
    %1221 = vmatpush.bf16.msra.mxu0 0
    %1222 = vmatpush.bf16.msra.mxu0 0
    %1223 = vmatpush.bf16.msra.mxu0 0
    %1224 = vmatpush.bf16.msra.mxu0 %v1212
    %1225 = vmatpush.bf16.msra.mxu0 %v1211
    %1226 = vmatmul.bf16.gmra.mxu0 %v1216
    %v1227 = vpop.f32.mrf.mxu0
    %v1228 = vadd.f32 %v1195, %v1227
    %v1229 = vpop.f32.mrf.mxu0
    %1230 = vdwg.mxu0
    %v1232 = vrot.slane %v1228, 1
    %v1233 = vperm.slane %v1228, 0
    %v1234 = vperm.slane %v1232, 0
    %v1235 = vld [vmem:[#allocation8 + $0x44] sm:$0xf]
    %v1236 = vld [vmem:[#allocation8 + $0x48] sm:$0xf]
    %v1237 = vld [vmem:[#allocation8 + $0x4c] sm:$0xf]
    %v1238 = vld [vmem:[#allocation8 + $0x50] sm:$0xf]
    %v1239 = vld [vmem:[#allocation10 + $0x18] sm:$0x1]
    %v1240 = vperm.slane %v1239, 0
    %v1245 = vunpack.c.l.b16 %v1235
    %v1246 = vunpack.c.l.b16 %v1236
    %v1247 = vunpack.c.l.b16 %v1237
    %v1248 = vunpack.c.l.b16 %v1238
    %v1249 = vpack.c.b16 %v1246, %v1245
    %v1250 = vpack.c.b16 %v1248, %v1247
    %v1254 = vsel %vm200, %v1189, 0
    %1256 = vmatpush.bf16.msra.mxu0 0
    %1257 = vmatpush.bf16.msra.mxu0 0
    %1258 = vmatpush.bf16.msra.mxu0 0
    %1259 = vmatpush.bf16.msra.mxu0 0
    %1260 = vmatpush.bf16.msra.mxu0 0
    %1261 = vmatpush.bf16.msra.mxu0 0
    %1262 = vmatpush.bf16.msra.mxu0 %v1250
    %1263 = vmatpush.bf16.msra.mxu0 %v1249
    %1264 = vmatmul.bf16.gmra.mxu0 %v1254
    %v1265 = vpop.f32.mrf.mxu0
    %v1266 = vadd.f32 %v1240, %v1265
    %v1267 = vpop.f32.mrf.mxu0
    %v1268 = vadd.f32 %v1240, %v1267
    %1269 = vdwg.mxu0
    %v1270 = vlaneseq
    %v1271 = vshrl.u32 %v1270, 7
    %v1272 = vadd.s32 %v1271, 8
    %vm1273 = vcmp.lt.s32.totalorder %v1271, 0
    %v1274 = vsub.s32 0, %v1271
    %v1275 = vsel %vm1273, %v1274, %v1271
    %v1276 = vshrl.u32 %v1275, 3
    %v1277 = vand.u32 %v1275, 7
    %v1278 = vsub.s32 0, %v1277
    %v1279 = vsel %vm1273, %v1278, %v1277
    %vm1280 = vcmp.lt.s32.totalorder %v1272, 0
    %v1281 = vsub.s32 0, %v1272
    %v1282 = vsel %vm1280, %v1281, %v1272
    %v1283 = vshrl.u32 %v1282, 3
    %v1284 = vand.u32 %v1282, 7
    %v1285 = vsub.s32 0, %v1284
    %v1286 = vsel %vm1280, %v1285, %v1284
    %vm1287 = vcmp.ne.s32.totalorder %v1279, 0
    %vm1288 = vcmp.ne.s32.totalorder %v1286, 0
    %vm1289 = vcmp.lt.s32.totalorder %v1279, 0
    %vm1290 = vcmp.lt.s32.totalorder %v1286, 0
    %vm1291 = vmand %vm1289, %vm1287
    %vm1292 = vmand %vm1290, %vm1288
    %v1293 = vadd.s32 %v1279, 8
    %v1294 = vadd.s32 %v1286, 8
    %v1295 = vsel %vm1291, %v1293, %v1279
    %v1296 = vsel %vm1292, %v1294, %v1286
    %1297 = vrot.lane.b32.xlu0 %v1233, 96
    %v1298 = vpop.permute.xlu0 %1297
    %1299 = vrot.lane.b32.xlu0 %v1234, 96
    %v1300 = vpop.permute.xlu0 %1299
    %v1303 = vadd.f32 %v168, %v1298
    %v1304 = vadd.f32 %v169, %v1300
    %vm1305 = vcmp.ge.s32.totalorder %v1295, 1
    %vm1306 = vcmp.ge.s32.totalorder %v1296, 1
    %1309 = vrot.lane.b32.xlu0 %v1303, 32
    %v1310 = vpop.permute.xlu0 %1309
    %1311 = vrot.lane.b32.xlu0 %v1304, 32
    %v1312 = vpop.permute.xlu0 %1311
    %v1315 = vrot.slane %v1310, 7
    %v1316 = vrot.slane %v1312, 7
    %vm1317 = vcmp.lt.s32.totalorder %v1271, 1
    %v1318 = vsel %vm1317, %v1315, %v1316
    %v1319 = vsel %vm1317, %v1316, %v1315
    %v1320 = vsel %vm1305, %v1319, 0.0
    %v1321 = vsel %vm1306, %v1318, 0.0
    %vm1322 = vcmp.lt.s32.totalorder %v1295, 7
    %vm1323 = vcmp.lt.s32.totalorder %v1296, 7
    %v1324 = vrot.slane %v1310, 1
    %v1325 = vrot.slane %v1312, 1
    %vm1326 = vcmp.lt.s32.totalorder %v1271, 7
    %v1327 = vsel %vm1326, %v1324, %v1325
    %v1328 = vsel %vm1326, %v1325, %v1324
    %v1329 = vsel %vm1322, %v1327, 0.0
    %v1330 = vsel %vm1323, %v1328, 0.0
    %1331 = vrot.lane.b32.xlu0 %v1303, 48
    %v1332 = vpop.permute.xlu0 %1331
    %1333 = vrot.lane.b32.xlu0 %v1304, 48
    %v1334 = vpop.permute.xlu0 %1333
    %1339 = vrot.lane.b32.xlu0 %v1329, 32
    %v1340 = vpop.permute.xlu0 %1339
    %1341 = vrot.lane.b32.xlu0 %v1330, 32
    %v1342 = vpop.permute.xlu0 %1341
    %vm1345 = vcmask 130048
    %v1346 = vsel %vm1345, %v1320, %v1332
    %v1347 = vsel %vm1345, %v1321, %v1334
    %v1348 = vsel %vm200, %v1346, %v1340
    %v1349 = vsel %vm200, %v1347, %v1342
    %v1350 = vpack.c.bf16 %v1349, %v1348
    %v1351 = vld [vmem:[#allocation8 + $0x54] sm:$0xf]
    %v1352 = vld [vmem:[#allocation8 + $0x58] sm:$0xf]
    %v1353 = vld [vmem:[#allocation8 + $0x5c] sm:$0xf]
    %v1354 = vld [vmem:[#allocation8 + $0x60] sm:$0xf]
    %v1355 = vld [vmem:[#allocation8 + $0x64] sm:$0xf]
    %v1356 = vld [vmem:[#allocation8 + $0x68] sm:$0xf]
    %v1357 = vld [vmem:[#allocation10 + $0x20] sm:$0x1]
    %v1358 = vperm.slane %v1357, 0
    %v1365 = vunpack.c.l.b16 %v1351
    %v1366 = vunpack.c.l.b16 %v1352
    %v1367 = vunpack.c.l.b16 %v1353
    %v1368 = vunpack.c.l.b16 %v1354
    %v1369 = vunpack.c.l.b16 %v1355
    %v1370 = vunpack.c.l.b16 %v1356
    %v1371 = vpack.c.b16 %v1366, %v1365
    %v1372 = vpack.c.b16 %v1368, %v1367
    %v1373 = vpack.c.b16 %v1370, %v1369
    %vm1377 = vcmask 392192
    %v1379 = vsel %vm1377, %v1350, 0
    %1381 = vmatpush.bf16.msra.mxu0 0
    %1382 = vmatpush.bf16.msra.mxu0 0
    %1383 = vmatpush.bf16.msra.mxu0 0
    %1384 = vmatpush.bf16.msra.mxu0 0
    %1385 = vmatpush.bf16.msra.mxu0 0
    %1386 = vmatpush.bf16.msra.mxu0 %v1373
    %1387 = vmatpush.bf16.msra.mxu0 %v1372
    %1388 = vmatpush.bf16.msra.mxu0 %v1371
    %1389 = vmatmul.bf16.gmra.mxu0 %v1379
    %v1390 = vpop.f32.mrf.mxu0
    %v1391 = vadd.f32 %v1358, %v1390
    %v1392 = vpop.f32.mrf.mxu0
    %v1393 = vadd.f32 %v1358, %v1392
    %1394 = vdwg.mxu0
    %v1395 = vadd.f32 %v1391, %v1266
    %v1396 = vadd.f32 %v1393, %v1268
    %v1397 = vtanh.pop %v1395
    %v1398 = vtanh.pop %v1396
    %v1399 = vxor.u32 %v1395, 2147483648
    %v1400 = vxor.u32 %v1396, 2147483648
    %v1401 = vmul.f32 %v1399, 1.442695
    %v1402 = vpow.pop %v1401
    %v1403 = vmul.f32 %v1400, 1.442695
    %v1404 = vpow.pop %v1403
    %v1405 = vadd.f32 %v1402, 1.0
    %v1406 = vadd.f32 %v1404, 1.0
    %v1407 = vrcp.pop %v1405
    %v1408 = vmul.f32 %v1405, %v1407
    %v1409 = vsub.f32 1.0, %v1408
    %v1410 = vmul.f32 %v1407, %v1409
    %v1411 = vadd.f32 %v1407, %v1410
    %vm1412 = vweird.f32 %v1405
    %vm1413 = vweird.f32 %v1407
    %vm1414 = vmor %vm1412, %vm1413
    %v1415 = vsel %vm1414, %v1407, %v1411
    %v1416 = vand.u32 2147483647, %v1405
    %vm1417 = vcmp.eq.f32.partialorder %v1416, 8.507059e+37
    %v1418 = vand.u32 %v1405, 2147483648
    %v1419 = vor.u32 1.1754944e-38, %v1418
    %v1420 = vsel %vm1417, %v1419, %v1415
    %v1421 = vmul.f32 1.0, %v1420
    %v1422 = vrcp.pop %v1406
    %v1423 = vmul.f32 %v1406, %v1422
    %v1424 = vsub.f32 1.0, %v1423
    %v1425 = vmul.f32 %v1422, %v1424
    %v1426 = vadd.f32 %v1422, %v1425
    %vm1427 = vweird.f32 %v1406
    %vm1428 = vweird.f32 %v1422
    %vm1429 = vmor %vm1427, %vm1428
    %v1430 = vsel %vm1429, %v1422, %v1426
    %v1431 = vand.u32 2147483647, %v1406
    %vm1432 = vcmp.eq.f32.partialorder %v1431, 8.507059e+37
    %v1433 = vand.u32 %v1406, 2147483648
    %v1434 = vor.u32 1.1754944e-38, %v1433
    %v1435 = vsel %vm1432, %v1434, %v1430
    %v1436 = vmul.f32 1.0, %v1435
    %1439 = vrot.lane.b32.xlu0 %v1421, 112
    %v1440 = vpop.permute.xlu0 %1439
    %1441 = vrot.lane.b32.xlu0 %v1436, 112
    %v1442 = vpop.permute.xlu0 %1441
    %v1445 = vmul.f32 %v1397, %v1440
    %v1446 = vmul.f32 %v1398, %v1442
    %v1447 = vpack.c.bf16 %v1446, %v1445
    %v1448 = vld [vmem:[#allocation8 + $0x6c] sm:$0xf]
    %v1449 = vld [vmem:[#allocation8 + $0x70] sm:$0xf]
    %v1450 = vld [vmem:[#allocation10 + $0x28] sm:$0x1]
    %v1451 = vperm.slane %v1450, 0
    %v1454 = vunpack.c.l.b16 %v1448
    %v1455 = vunpack.c.l.b16 %v1449
    %v1456 = vpack.c.b16 %v1455, %v1454
    %v1459 = vsel %vm1345, %v1447, 0
    %1461 = vmatpush.bf16.msra.mxu0 0
    %1462 = vmatpush.bf16.msra.mxu0 0
    %1463 = vmatpush.bf16.msra.mxu0 0
    %1464 = vmatpush.bf16.msra.mxu0 0
    %1465 = vmatpush.bf16.msra.mxu0 0
    %1466 = vmatpush.bf16.msra.mxu0 0
    %1467 = vmatpush.bf16.msra.mxu0 0
    %1468 = vmatpush.bf16.msra.mxu0 %v1456
    %1469 = vmatmul.bf16.gmra.mxu0 %v1459
    %v1470 = vpop.f32.mrf.mxu0
    %v1471 = vadd.f32 %v1451, %v1470
    %v1472 = vpop.f32.mrf.mxu0
    %v1473 = vadd.f32 %v1451, %v1472
    %1474 = vdwg.mxu0
    %1477 = vrot.lane.b32.xlu0 %v1471, 96
    %v1478 = vpop.permute.xlu0 %1477
    %1479 = vrot.lane.b32.xlu0 %v1473, 96
    %v1480 = vpop.permute.xlu0 %1479
    %v1483 = vadd.f32 %v168, %v1478
    %v1484 = vadd.f32 %v169, %v1480
    %v1485 = vmul.f32 %v1483, 0.70710677
    %v1486 = vmul.f32 %v1484, 0.70710677
    %v1487 = vadd.f32 %v1471, 0.0
    %v1488 = vadd.f32 %v1473, 0.0
    %1489 = vrot.lane.b32.xlu0 %v1233, 80
    %v1490 = vpop.permute.xlu0 %1489
    %1491 = vrot.lane.b32.xlu0 %v1234, 80
    %v1492 = vpop.permute.xlu0 %1491
    %v1495 = vadd.f32 %v1485, %v1490
    %v1496 = vadd.f32 %v1486, %v1492
    %vm1497 = vcmp.ge.s32.totalorder %v1295, 2
    %vm1498 = vcmp.ge.s32.totalorder %v1296, 2
    %1501 = vrot.lane.b32.xlu0 %v1495, 32
    %v1502 = vpop.permute.xlu0 %1501
    %1503 = vrot.lane.b32.xlu0 %v1496, 32
    %v1504 = vpop.permute.xlu0 %1503
    %v1507 = vrot.slane %v1502, 6
    %v1508 = vrot.slane %v1504, 6
    %vm1509 = vcmp.lt.s32.totalorder %v1271, 2
    %v1510 = vsel %vm1509, %v1507, %v1508
    %v1511 = vsel %vm1509, %v1508, %v1507
    %v1512 = vsel %vm1497, %v1511, 0.0
    %v1513 = vsel %vm1498, %v1510, 0.0
    %vm1514 = vcmp.lt.s32.totalorder %v1295, 6
    %vm1515 = vcmp.lt.s32.totalorder %v1296, 6
    %v1516 = vrot.slane %v1502, 2
    %v1517 = vrot.slane %v1504, 2
    %vm1518 = vcmp.lt.s32.totalorder %v1271, 6
    %v1519 = vsel %vm1518, %v1516, %v1517
    %v1520 = vsel %vm1518, %v1517, %v1516
    %v1521 = vsel %vm1514, %v1519, 0.0
    %v1522 = vsel %vm1515, %v1520, 0.0
    %1523 = vrot.lane.b32.xlu0 %v1495, 48
    %v1524 = vpop.permute.xlu0 %1523
    %1525 = vrot.lane.b32.xlu0 %v1496, 48
    %v1526 = vpop.permute.xlu0 %1525
    %1531 = vrot.lane.b32.xlu0 %v1521, 32
    %v1532 = vpop.permute.xlu0 %1531
    %1533 = vrot.lane.b32.xlu0 %v1522, 32
    %v1534 = vpop.permute.xlu0 %1533
    %v1537 = vsel %vm1345, %v1512, %v1524
    %v1538 = vsel %vm1345, %v1513, %v1526
    %v1539 = vsel %vm200, %v1537, %v1532
    %v1540 = vsel %vm200, %v1538, %v1534
    %v1541 = vpack.c.bf16 %v1540, %v1539
    %v1542 = vld [vmem:[#allocation8 + $0x74] sm:$0xf]
    %v1543 = vld [vmem:[#allocation8 + $0x78] sm:$0xf]
    %v1544 = vld [vmem:[#allocation8 + $0x7c] sm:$0xf]
    %v1545 = vld [vmem:[#allocation8 + $0x80] sm:$0xf]
    %v1546 = vld [vmem:[#allocation8 + $0x84] sm:$0xf]
    %v1547 = vld [vmem:[#allocation8 + $0x88] sm:$0xf]
    %v1548 = vld [vmem:[#allocation10 + $0x30] sm:$0x1]
    %v1549 = vperm.slane %v1548, 0
    %v1556 = vunpack.c.l.b16 %v1542
    %v1557 = vunpack.c.l.b16 %v1543
    %v1558 = vunpack.c.l.b16 %v1544
    %v1559 = vunpack.c.l.b16 %v1545
    %v1560 = vunpack.c.l.b16 %v1546
    %v1561 = vunpack.c.l.b16 %v1547
    %v1562 = vpack.c.b16 %v1557, %v1556
    %v1563 = vpack.c.b16 %v1559, %v1558
    %v1564 = vpack.c.b16 %v1561, %v1560
    %v1569 = vsel %vm1377, %v1541, 0
    %1571 = vmatpush.bf16.msra.mxu0 0
    %1572 = vmatpush.bf16.msra.mxu0 0
    %1573 = vmatpush.bf16.msra.mxu0 0
    %1574 = vmatpush.bf16.msra.mxu0 0
    %1575 = vmatpush.bf16.msra.mxu0 0
    %1576 = vmatpush.bf16.msra.mxu0 %v1564
    %1577 = vmatpush.bf16.msra.mxu0 %v1563
    %1578 = vmatpush.bf16.msra.mxu0 %v1562
    %1579 = vmatmul.bf16.gmra.mxu0 %v1569
    %v1580 = vpop.f32.mrf.mxu0
    %v1581 = vadd.f32 %v1549, %v1580
    %v1582 = vpop.f32.mrf.mxu0
    %v1583 = vadd.f32 %v1549, %v1582
    %1584 = vdwg.mxu0
    %1587 = vrot.lane.b32.xlu0 %v1266, 96
    %v1588 = vpop.permute.xlu0 %1587
    %1589 = vrot.lane.b32.xlu0 %v1268, 96
    %v1590 = vpop.permute.xlu0 %1589
    %v1593 = vadd.f32 %v1581, %v1588
    %v1594 = vadd.f32 %v1583, %v1590
    %v1595 = vtanh.pop %v1593
    %v1596 = vtanh.pop %v1594
    %v1597 = vxor.u32 %v1593, 2147483648
    %v1598 = vxor.u32 %v1594, 2147483648
    %v1599 = vmul.f32 %v1597, 1.442695
    %v1600 = vpow.pop %v1599
    %v1601 = vmul.f32 %v1598, 1.442695
    %v1602 = vpow.pop %v1601
    %v1603 = vadd.f32 %v1600, 1.0
    %v1604 = vadd.f32 %v1602, 1.0
    %v1605 = vrcp.pop %v1603
    %v1606 = vmul.f32 %v1603, %v1605
    %v1607 = vsub.f32 1.0, %v1606
    %v1608 = vmul.f32 %v1605, %v1607
    %v1609 = vadd.f32 %v1605, %v1608
    %vm1610 = vweird.f32 %v1603
    %vm1611 = vweird.f32 %v1605
    %vm1612 = vmor %vm1610, %vm1611
    %v1613 = vsel %vm1612, %v1605, %v1609
    %v1614 = vand.u32 2147483647, %v1603
    %vm1615 = vcmp.eq.f32.partialorder %v1614, 8.507059e+37
    %v1616 = vand.u32 %v1603, 2147483648
    %v1617 = vor.u32 1.1754944e-38, %v1616
    %v1618 = vsel %vm1615, %v1617, %v1613
    %v1619 = vmul.f32 1.0, %v1618
    %v1620 = vrcp.pop %v1604
    %v1621 = vmul.f32 %v1604, %v1620
    %v1622 = vsub.f32 1.0, %v1621
    %v1623 = vmul.f32 %v1620, %v1622
    %v1624 = vadd.f32 %v1620, %v1623
    %vm1625 = vweird.f32 %v1604
    %vm1626 = vweird.f32 %v1620
    %vm1627 = vmor %vm1625, %vm1626
    %v1628 = vsel %vm1627, %v1620, %v1624
    %v1629 = vand.u32 2147483647, %v1604
    %vm1630 = vcmp.eq.f32.partialorder %v1629, 8.507059e+37
    %v1631 = vand.u32 %v1604, 2147483648
    %v1632 = vor.u32 1.1754944e-38, %v1631
    %v1633 = vsel %vm1630, %v1632, %v1628
    %v1634 = vmul.f32 1.0, %v1633
    %1637 = vrot.lane.b32.xlu0 %v1619, 112
    %v1638 = vpop.permute.xlu0 %1637
    %1639 = vrot.lane.b32.xlu0 %v1634, 112
    %v1640 = vpop.permute.xlu0 %1639
    %v1643 = vmul.f32 %v1595, %v1638
    %v1644 = vmul.f32 %v1596, %v1640
    %v1645 = vpack.c.bf16 %v1644, %v1643
    %v1646 = vld [vmem:[#allocation8 + $0x8c] sm:$0xf]
    %v1647 = vld [vmem:[#allocation8 + $0x90] sm:$0xf]
    %v1648 = vld [vmem:[#allocation10 + $0x38] sm:$0x1]
    %v1649 = vperm.slane %v1648, 0
    %v1652 = vunpack.c.l.b16 %v1646
    %v1653 = vunpack.c.l.b16 %v1647
    %v1654 = vpack.c.b16 %v1653, %v1652
    %v1657 = vsel %vm1345, %v1645, 0
    %1659 = vmatpush.bf16.msra.mxu0 0
    %1660 = vmatpush.bf16.msra.mxu0 0
    %1661 = vmatpush.bf16.msra.mxu0 0
    %1662 = vmatpush.bf16.msra.mxu0 0
    %1663 = vmatpush.bf16.msra.mxu0 0
    %1664 = vmatpush.bf16.msra.mxu0 0
    %1665 = vmatpush.bf16.msra.mxu0 0
    %1666 = vmatpush.bf16.msra.mxu0 %v1654
    %1667 = vmatmul.bf16.gmra.mxu0 %v1657
    %v1668 = vpop.f32.mrf.mxu0
    %v1669 = vadd.f32 %v1649, %v1668
    %v1670 = vpop.f32.mrf.mxu0
    %v1671 = vadd.f32 %v1649, %v1670
    %1672 = vdwg.mxu0
    %v1673 = vadd.f32 %v1487, %v1669
    %v1674 = vadd.f32 %v1488, %v1671
    %v1675 = vmul.f32 %v1673, 0.70710677
    %v1676 = vmul.f32 %v1674, 0.70710677
    %v1677 = vmax.f32 %v1675, 0.0
    %v1678 = vmax.f32 %v1676, 0.0
    %v1679 = vpack.c.bf16 %v1678, %v1677
    %v1680 = vld [vmem:[#allocation8 + $0x94] sm:$0xf]
    %v1681 = vld [vmem:[#allocation8 + $0x98] sm:$0xf]
    %v1682 = vld [vmem:[#allocation10 + $0x40] sm:$0x1]
    %v1683 = vperm.slane %v1682, 0
    %1685 = vrot.lane.b32.xlu0 %v1679, 112
    %v1686 = vpop.permute.xlu0 %1685
    %v1689 = vunpack.c.l.b16 %v1680
    %v1690 = vunpack.c.l.b16 %v1681
    %v1691 = vpack.c.b16 %v1690, %v1689
    %v1694 = vsel %vm1345, %v1686, 0
    %1696 = vmatpush.bf16.msra.mxu0 0
    %1697 = vmatpush.bf16.msra.mxu0 0
    %1698 = vmatpush.bf16.msra.mxu0 0
    %1699 = vmatpush.bf16.msra.mxu0 0
    %1700 = vmatpush.bf16.msra.mxu0 0
    %1701 = vmatpush.bf16.msra.mxu0 0
    %1702 = vmatpush.bf16.msra.mxu0 0
    %1703 = vmatpush.bf16.msra.mxu0 %v1691
    %1704 = vmatmul.bf16.gmra.mxu0 %v1694
    %v1705 = vpop.f32.mrf.mxu0
    %v1706 = vadd.f32 %v1683, %v1705
    %v1707 = vpop.f32.mrf.mxu0
    %v1708 = vadd.f32 %v1683, %v1707
    %1709 = vdwg.mxu0
    %v1710 = vadd.f32 %v1706, %v1183
    %v1711 = vadd.f32 %v1708, %v1184
    %v1712 = vpack.c.bf16 %v1711, %v1710
    %v1713 = vld [vmem:[#allocation8 + $0x9c] sm:$0xf]
    %v1714 = vld [vmem:[#allocation8 + $0xa0] sm:$0xf]
    %v1715 = vld [vmem:[#allocation8 + $0xa4] sm:$0xf]
    %v1716 = vld [vmem:[#allocation8 + $0xa8] sm:$0xf]
    %v1717 = vld [vmem:[#allocation10 + $0x48] sm:$0x1]
    %v1718 = vperm.slane %v1717, 0
    %v1723 = vunpack.c.l.b16 %v1713
    %v1724 = vunpack.c.l.b16 %v1714
    %v1725 = vunpack.c.l.b16 %v1715
    %v1726 = vunpack.c.l.b16 %v1716
    %v1727 = vpack.c.b16 %v1724, %v1723
    %v1728 = vpack.c.b16 %v1726, %v1725
    %v1732 = vsel %vm200, %v1712, 0
    %1734 = vmatpush.bf16.msra.mxu0 0
    %1735 = vmatpush.bf16.msra.mxu0 0
    %1736 = vmatpush.bf16.msra.mxu0 0
    %1737 = vmatpush.bf16.msra.mxu0 0
    %1738 = vmatpush.bf16.msra.mxu0 0
    %1739 = vmatpush.bf16.msra.mxu0 0
    %1740 = vmatpush.bf16.msra.mxu0 %v1728
    %1741 = vmatpush.bf16.msra.mxu0 %v1727
    %1742 = vmatmul.bf16.gmra.mxu0 %v1732
    %v1743 = vpop.f32.mrf.mxu0
    %v1744 = vadd.f32 %v1718, %v1743
    %v1745 = vpop.f32.mrf.mxu0
    %v1746 = vadd.f32 %v1718, %v1745
    %1747 = vdwg.mxu0
    %v1748 = vmul.f32 %v1744, %v1744
    %v1749 = vmul.f32 %v1746, %v1746
    %v1750 = vmul.f32 %v1744, %v1748
    %v1751 = vmul.f32 %v1746, %v1749
    %v1752 = vmul.f32 %v1750, 0.044715
    %v1753 = vmul.f32 %v1751, 0.044715
    %v1754 = vadd.f32 %v1744, %v1752
    %v1755 = vadd.f32 %v1746, %v1753
    %v1756 = vmul.f32 %v1754, 0.7978846
    %v1757 = vmul.f32 %v1755, 0.7978846
    %v1758 = vtanh.pop %v1756
    %v1759 = vtanh.pop %v1757
    %v1760 = vadd.f32 %v1758, 1.0
    %v1761 = vadd.f32 %v1759, 1.0
    %v1762 = vmul.f32 %v1760, 0.5
    %v1763 = vmul.f32 %v1761, 0.5
    %v1764 = vmul.f32 %v1744, %v1762
    %v1765 = vmul.f32 %v1746, %v1763
    %v1766 = vld [vmem:[#allocation8 + $0xac] sm:$0x1]
    %v1767 = vunpack.c.l.bf16 %v1766
    %v1768 = vperm.slane %v1767, 0
    %v1769 = vmul.f32 %v1764, %v1768
    %v1770 = vmul.f32 %v1765, %v1768
    %vm1771 = vcmask 523264
    %v1772 = vsel %vm1771, %v1769, 0.0
    %1773 = vadd.xlane.f32.xlu0 %v1772
    %v1774 = vpop.xlane.xlu0 %1773
    %v1775 = vsel %vm1771, %v1770, 0.0
    %1776 = vadd.xlane.f32.xlu0 %v1775
    %v1777 = vpop.xlane.xlu0 %1776
    %v1778 = vld [vmem:[#allocation10 + $0x50] sm:$0x1]
    %v1779 = vperm.slane %v1778, 0
    %v1780 = vadd.f32 %v1774, %v1779
    %v1781 = vadd.f32 %v1777, %v1779
    %vm1782 = vcmask 7168
    %1783 = vst.msk [vmem:[%s5] sm:$0xff] %vm1782, %v1780
    %1784 = vst.msk [vmem:[%s5 + $0x8] sm:$0xff] %vm1782, %v1781
    // Predicated region
    $region42: #{tpu_custom_call.1} parent=1 // pred_check
      _
    $region43: #{tpu_custom_call.1} parent=1 // pred_check_branch
      %1786 = sbr.rel (0) target = $region45
    $region44: #{tpu_custom_call.1} parent=1 // pred_region
      _
    $region45: #{tpu_custom_call.1} parent=1 // pred_fallthru
      _
    // Predicated region
    $region46: #{tpu_custom_call.1} parent=1 // pred_check
      _
    $region47: #{tpu_custom_call.1} parent=1 // pred_check_branch
      %1788 = sbr.rel (0) target = $region49
    $region48: #{tpu_custom_call.1} parent=1 // pred_region
      _
    $region49: #{tpu_custom_call.1} parent=1 // pred_fallthru
      _
    %1789 = vsyncpa [#allocation4], 1
    %1790 = vsyncpa [#allocation6], 1
    %1791 = vsyncpa [#allocation9], 1

</llo_original>
